<compile_context>
chip_gen: v6e
topology: v6e:2x2x1
jax: 0.10.0
libtpu: 0.0.40
codegen_flags: <defaults>
</compile_context>

<pallas_src>
import jax
import jax.numpy as jnp
from jax.experimental import pallas as pl
from jax.experimental.pallas import tpu as pltpu

LANE = 128      # TPU lane width (f32)
SUBLANE = 8     # TPU sublane count (f32)
_SCOPED_VMEM_DEFAULT = 16 * 1024 * 1024   # v5e's scoped-VMEM default (most conservative)


def mlp_kernel(xT_ref, w1_ref, b1_ref, w2_ref, b2_ref, w3_ref, b3_ref, o_ref):
    """One batch tile (batch on lanes): logits^T = W3 @ relu(W2 @ relu(W1 @ x^T + b1) + b2) + b3."""
    # In-kernel bf16 cast of the f32 x tile (VPU; rides in an otherwise idle VALU slot).
    xT = xT_ref[...].astype(jnp.bfloat16)
    # fc1 + relu1: [h1, in] @ [in, tb] -> [h1, tb]; f32 accumulate, f32 bias/ReLU (v5e-safe).
    h1 = jnp.dot(w1_ref[...], xT, preferred_element_type=jnp.float32)
    h1 = jnp.maximum(h1 + b1_ref[...], 0.0)
    # fc2 + relu2: [h2, h1] @ [h1, tb] -> [h2, tb]
    h2 = jnp.dot(w2_ref[...], h1.astype(jnp.bfloat16), preferred_element_type=jnp.float32)
    h2 = jnp.maximum(h2 + b2_ref[...], 0.0)
    # fc3 (logits; class dim on sublanes, batch on lanes): [nc, h2] @ [h2, tb] -> [nc, tb]
    out = jnp.dot(w3_ref[...], h2.astype(jnp.bfloat16), preferred_element_type=jnp.float32)
    o_ref[...] = (out + b3_ref[...]).astype(o_ref.dtype)


def _round_up(x, m):
    return ((x + m - 1) // m) * m


def _choose_batch_tile(batch):
    """Batch sits on the lane axis, so tiles must be multiples of 128 (f32 lanes).

    Aim for >=2 grid steps (x/out DMA pipelining; shards across v7x's 2 TensorCores),
    tiles capped at 512 rows; the extra ~0.35us/step is noise on 1-TC chips (v5e/v6e).
    """
    if batch <= LANE:
        return LANE
    half = _round_up((batch + 1) // 2, LANE)
    return min(4 * LANE, half)


def _physical_vmem_cap():
    """~3/4 of the chip's physical VMEM (~48 MiB on v7x, ~96 MiB on v5e/v6e)."""
    phys = 64 * 1024 * 1024                       # conservative fallback (v7x)
    try:
        phys = int(pltpu.get_tpu_info().vmem_capacity_bytes)
    except Exception:
        pass
    return (phys * 3) // 4


def _vmem_bytes_estimate(tb, in_dim, h1_dim, h2_dim, nc_pad, single_buffer_weights):
    """Rough VMEM footprint: double-buffered x/out tiles, resident weights, f32 acts."""
    bf16, f32 = 2, 4
    wf = 1 if single_buffer_weights else 2
    x_bytes = 2 * in_dim * tb * f32
    out_bytes = 2 * nc_pad * tb * f32
    w_bytes = wf * (h1_dim * in_dim + h2_dim * h1_dim + nc_pad * h2_dim) * bf16
    b_bytes = wf * (h1_dim + h2_dim + nc_pad) * f32
    act_bytes = tb * (in_dim * bf16 + (h1_dim + h2_dim + nc_pad) * (f32 + bf16))
    return x_bytes + out_bytes + w_bytes + b_bytes + act_bytes


def init_params(key, input_size, hidden_size1, hidden_size2, num_classes):
    """Deterministic synthetic parameters in PyTorch nn.Linear layout: W [out, in], b [out]."""
    ks = jax.random.split(key, 6)

    def linear(kw, kb, fan_in, fan_out):
        bound = 1.0 / jnp.sqrt(fan_in)
        w = jax.random.uniform(kw, (fan_out, fan_in), jnp.float32, -bound, bound)
        b = jax.random.uniform(kb, (fan_out,), jnp.float32, -bound, bound)
        return w, b

    w1, b1 = linear(ks[0], ks[1], input_size, hidden_size1)
    w2, b2 = linear(ks[2], ks[3], hidden_size1, hidden_size2)
    w3, b3 = linear(ks[4], ks[5], hidden_size2, num_classes)
    return (w1, b1, w2, b2, w3, b3)


def prepare_params(params):
    """One-time, hoisted out of the per-call forward: bf16 weights in [out, in] layout,
    f32 column biases, class dim padded to a sublane multiple so the (nc, tb) output
    block is always legal."""
    w1, b1, w2, b2, w3, b3 = params
    num_classes, h2_dim = w3.shape
    nc_pad = _round_up(num_classes, SUBLANE)
    w3p = jnp.zeros((nc_pad, h2_dim), w3.dtype).at[:num_classes].set(w3)
    b3p = jnp.zeros((nc_pad,), b3.dtype).at[:num_classes].set(b3)
    return {
        "w1": w1.astype(jnp.bfloat16), "b1": b1.reshape(-1, 1).astype(jnp.float32),
        "w2": w2.astype(jnp.bfloat16), "b2": b2.reshape(-1, 1).astype(jnp.float32),
        "w3": w3p.astype(jnp.bfloat16), "b3": b3p.reshape(-1, 1).astype(jnp.float32),
        "num_classes": num_classes,
    }


def complex_classifier_forward(x, prep, *, batch_tile=None):
    """Fused 3-layer MLP forward. x: [B, input_size] f32 -> [B, num_classes] f32."""
    w1, b1 = prep["w1"], prep["b1"]
    w2, b2 = prep["w2"], prep["b2"]
    w3, b3 = prep["w3"], prep["b3"]
    num_classes = prep["num_classes"]

    B, in_dim = x.shape
    h1_dim = w1.shape[0]
    h2_dim = w2.shape[0]
    nc_pad = w3.shape[0]

    # --- batch on the lane axis: one cheap transpose, pad to a tile multiple ---
    tb = batch_tile or _choose_batch_tile(B)
    Bp = _round_up(B, tb)
    xT = x.T                                  # [in_dim, B], stays f32 (cast happens in-kernel)
    if Bp != B:
        xT = jnp.pad(xT, ((0, 0), (0, Bp - B)))
    grid = (Bp // tb,)

    # --- generation-aware VMEM budget ---
    est = _vmem_bytes_estimate(tb, in_dim, h1_dim, h2_dim, nc_pad, True)
    vmem_limit = None
    if est > _SCOPED_VMEM_DEFAULT:
        vmem_limit = min(int(est * 3 // 2), _physical_vmem_cap())

    cost = pl.CostEstimate(
        flops=2 * Bp * (in_dim * h1_dim + h1_dim * h2_dim + h2_dim * nc_pad),
        transcendentals=0,
        bytes_accessed=int(xT.size * 4 + (w1.size + w2.size + w3.size) * 2
                           + (h1_dim + h2_dim + nc_pad) * 4 + nc_pad * Bp * 4),
    )

    def run(single_buffer_weights):
        wkw = {"pipeline_mode": pl.Buffered(1)} if single_buffer_weights else {}

        def resident(shape):
            return pl.BlockSpec(shape, lambda i: (0, 0), **wkw)

        return pl.pallas_call(
            mlp_kernel,
            out_shape=jax.ShapeDtypeStruct((nc_pad, Bp), jnp.float32),
            grid_spec=pltpu.PrefetchScalarGridSpec(
                num_scalar_prefetch=0,
                grid=grid,
                in_specs=[
                    pl.BlockSpec((in_dim, tb), lambda i: (0, i)),  # x^T tile (f32, lane-dense)
                    resident((h1_dim, in_dim)),                    # W1 [out, in] bf16, resident
                    resident((h1_dim, 1)),                         # b1 f32
                    resident((h2_dim, h1_dim)),                    # W2
                    resident((h2_dim, 1)),                         # b2
                    resident((nc_pad, h2_dim)),                    # W3 (class dim sublane-padded)
                    resident((nc_pad, 1)),                         # b3
                ],
                out_specs=pl.BlockSpec((nc_pad, tb), lambda i: (0, i)),  # lane-dense logits^T
            ),
            compiler_params=pltpu.CompilerParams(
                dimension_semantics=("parallel",),
                vmem_limit_bytes=vmem_limit,
            ),
            cost_estimate=cost,
        )(xT, w1, b1, w2, b2, w3, b3)

    try:
        outT = run(True)
    except Exception:
        # Fallback for JAX versions where BlockSpec pipeline_mode / pl.Buffered(1) is
        # unsupported for top-level pallas_call pipelining (double-buffered residents).
        outT = run(False)

    return outT[:num_classes, :B].T


def reference_forward(x, params):
    """Same math as the kernel (bf16 matmul inputs, f32 accumulate/bias/ReLU)."""
    w1, b1, w2, b2, w3, b3 = params
    bf = jnp.bfloat16
    h1 = jnp.maximum(jnp.dot(x.astype(bf), w1.T.astype(bf),
                             preferred_element_type=jnp.float32) + b1, 0.0)
    h2 = jnp.maximum(jnp.dot(h1.astype(bf), w2.T.astype(bf),
                             preferred_element_type=jnp.float32) + b2, 0.0)
    return jnp.dot(h2.astype(bf), w3.T.astype(bf),
                   preferred_element_type=jnp.float32) + b3


if __name__ == "__main__":
    # Small shapes consistent with the module's forward; batch gives 2 grid steps
    # (x/out DMA pipelining; one step per TensorCore on v7x).
    batch = 256
    input_size = 32
    hidden_size1 = 64
    hidden_size2 = 32
    num_classes = 8

    key = jax.random.PRNGKey(0)
    kx, kp = jax.random.split(key)
    x = jax.random.normal(kx, (batch, input_size), dtype=jnp.float32)
    params = init_params(kp, input_size, hidden_size1, hidden_size2, num_classes)
    prep = prepare_params(params)           # one-time weight prep, hoisted out of forward

    out = complex_classifier_forward(x, prep)
    out = jax.block_until_ready(out)
    assert out.shape == (batch, num_classes)

    ref = reference_forward(x, params)
    assert jnp.allclose(out, ref, atol=2e-3, rtol=2e-3), (
        float(jnp.max(jnp.abs(out - ref))))

    # Loose sanity check against a pure-f32 reference as well.
    w1, b1, w2, b2, w3, b3 = params
    ref_f32 = jnp.maximum(jnp.maximum(x @ w1.T + b1, 0.0) @ w2.T + b2, 0.0) @ w3.T + b3
    assert jnp.allclose(out, ref_f32, atol=5e-2, rtol=5e-2)

    print("KERNEL_OK")
</pallas_src>

<mosaic_0001>
module attributes {stable_mosaic.version = 11 : i64} {
  func.func @mlp_kernel(%arg0: i32, %arg1: memref<32x128xf32, #tpu.memory_space<vmem>>, %arg2: memref<64x32xbf16, #tpu.memory_space<vmem>>, %arg3: memref<64x1xf32, #tpu.memory_space<vmem>>, %arg4: memref<32x64xbf16, #tpu.memory_space<vmem>>, %arg5: memref<32x1xf32, #tpu.memory_space<vmem>>, %arg6: memref<8x32xbf16, #tpu.memory_space<vmem>>, %arg7: memref<8x1xf32, #tpu.memory_space<vmem>>, %arg8: memref<8x128xf32, #tpu.memory_space<vmem>>) attributes {dimension_semantics = [#tpu.dimension_semantics<parallel>], iteration_bounds = array<i64: 2>, scalar_prefetch = 0 : i64, scratch_operands = 0 : i64, tpu.core_type = #tpu.core_type<tc>, window_params = [{transform_indices = @transform_0, window_bounds = array<i64: 32, 128>}, {pipeline_mode = #tpu.pipeline_mode<synchronous>, transform_indices = @transform_1, window_bounds = array<i64: 64, 32>}, {pipeline_mode = #tpu.pipeline_mode<synchronous>, transform_indices = @transform_2, window_bounds = array<i64: 64, 1>}, {pipeline_mode = #tpu.pipeline_mode<synchronous>, transform_indices = @transform_3, window_bounds = array<i64: 32, 64>}, {pipeline_mode = #tpu.pipeline_mode<synchronous>, transform_indices = @transform_4, window_bounds = array<i64: 32, 1>}, {pipeline_mode = #tpu.pipeline_mode<synchronous>, transform_indices = @transform_5, window_bounds = array<i64: 8, 32>}, {pipeline_mode = #tpu.pipeline_mode<synchronous>, transform_indices = @transform_6, window_bounds = array<i64: 8, 1>}, {transform_indices = @transform_7, window_bounds = array<i64: 8, 128>}]} {
    %c0 = arith.constant 0 : index
    %c0_0 = arith.constant 0 : index
    %0 = vector.load %arg1[%c0, %c0_0] : memref<32x128xf32, #tpu.memory_space<vmem>>, vector<32x128xf32>
    %1 = arith.truncf %0 : vector<32x128xf32> to vector<32x128xbf16>
    %c0_1 = arith.constant 0 : index
    %c0_2 = arith.constant 0 : index
    %2 = vector.load %arg2[%c0_1, %c0_2] : memref<64x32xbf16, #tpu.memory_space<vmem>>, vector<64x32xbf16>
    %cst = arith.constant dense<0.000000e+00> : vector<64x128xf32>
    %3 = tpu.matmul %2, %1, %cst {dimension_numbers = #tpu.dot_dimension_numbers<[1], [0], [0], [1], [0, 0, 1, 1], [], []>} : vector<64x32xbf16>, vector<32x128xbf16>, vector<64x128xf32> -> vector<64x128xf32>
    %c0_3 = arith.constant 0 : index
    %c0_4 = arith.constant 0 : index
    %4 = vector.load %arg3[%c0_3, %c0_4] : memref<64x1xf32, #tpu.memory_space<vmem>>, vector<64x1xf32>
    %5 = vector.broadcast %4 : vector<64x1xf32> to vector<64x128xf32>
    %6 = arith.addf %3, %5 : vector<64x128xf32>
    %cst_5 = arith.constant 0.000000e+00 : f32
    %7 = vector.broadcast %cst_5 : f32 to vector<64x128xf32>
    %8 = arith.maximumf %6, %7 : vector<64x128xf32>
    %c0_6 = arith.constant 0 : index
    %c0_7 = arith.constant 0 : index
    %9 = vector.load %arg4[%c0_6, %c0_7] : memref<32x64xbf16, #tpu.memory_space<vmem>>, vector<32x64xbf16>
    %10 = arith.truncf %8 : vector<64x128xf32> to vector<64x128xbf16>
    %cst_8 = arith.constant dense<0.000000e+00> : vector<32x128xf32>
    %11 = tpu.matmul %9, %10, %cst_8 {dimension_numbers = #tpu.dot_dimension_numbers<[1], [0], [0], [1], [0, 0, 1, 1], [], []>} : vector<32x64xbf16>, vector<64x128xbf16>, vector<32x128xf32> -> vector<32x128xf32>
    %c0_9 = arith.constant 0 : index
    %c0_10 = arith.constant 0 : index
    %12 = vector.load %arg5[%c0_9, %c0_10] : memref<32x1xf32, #tpu.memory_space<vmem>>, vector<32x1xf32>
    %13 = vector.broadcast %12 : vector<32x1xf32> to vector<32x128xf32>
    %14 = arith.addf %11, %13 : vector<32x128xf32>
    %cst_11 = arith.constant 0.000000e+00 : f32
    %15 = vector.broadcast %cst_11 : f32 to vector<32x128xf32>
    %16 = arith.maximumf %14, %15 : vector<32x128xf32>
    %c0_12 = arith.constant 0 : index
    %c0_13 = arith.constant 0 : index
    %17 = vector.load %arg6[%c0_12, %c0_13] : memref<8x32xbf16, #tpu.memory_space<vmem>>, vector<8x32xbf16>
    %18 = arith.truncf %16 : vector<32x128xf32> to vector<32x128xbf16>
    %cst_14 = arith.constant dense<0.000000e+00> : vector<8x128xf32>
    %19 = tpu.matmul %17, %18, %cst_14 {dimension_numbers = #tpu.dot_dimension_numbers<[1], [0], [0], [1], [0, 0, 1, 1], [], []>} : vector<8x32xbf16>, vector<32x128xbf16>, vector<8x128xf32> -> vector<8x128xf32>
    %c0_15 = arith.constant 0 : index
    %c0_16 = arith.constant 0 : index
    %20 = vector.load %arg7[%c0_15, %c0_16] : memref<8x1xf32, #tpu.memory_space<vmem>>, vector<8x1xf32>
    %21 = vector.broadcast %20 : vector<8x1xf32> to vector<8x128xf32>
    %22 = arith.addf %19, %21 : vector<8x128xf32>
    %c0_17 = arith.constant 0 : index
    %c0_18 = arith.constant 0 : index
    %23 = vector.load %arg8[%c0_17, %c0_18] : memref<8x128xf32, #tpu.memory_space<vmem>>, vector<8x128xf32>
    tpu.vector_store %arg8[%c0_17, %c0_18], %22 {strides = array<i32>} : memref<8x128xf32, #tpu.memory_space<vmem>>, vector<8x128xf32>,
    return
  }
  func.func @transform_0(%arg0: i32) -> (i32, i32) {
    %c0_i32 = arith.constant 0 : i32
    %c0_i32_0 = arith.constant 0 : i32
    return %c0_i32, %arg0 : i32, i32
  }
  func.func @transform_1(%arg0: i32) -> (i32, i32) {
    %c0_i32 = arith.constant 0 : i32
    %c0_i32_0 = arith.constant 0 : i32
    %c0_i32_1 = arith.constant 0 : i32
    return %c0_i32, %c0_i32_0 : i32, i32
  }
  func.func @transform_2(%arg0: i32) -> (i32, i32) {
    %c0_i32 = arith.constant 0 : i32
    %c0_i32_0 = arith.constant 0 : i32
    %c0_i32_1 = arith.constant 0 : i32
    return %c0_i32, %c0_i32_0 : i32, i32
  }
  func.func @transform_3(%arg0: i32) -> (i32, i32) {
    %c0_i32 = arith.constant 0 : i32
    %c0_i32_0 = arith.constant 0 : i32
    %c0_i32_1 = arith.constant 0 : i32
    return %c0_i32, %c0_i32_0 : i32, i32
  }
  func.func @transform_4(%arg0: i32) -> (i32, i32) {
    %c0_i32 = arith.constant 0 : i32
    %c0_i32_0 = arith.constant 0 : i32
    %c0_i32_1 = arith.constant 0 : i32
    return %c0_i32, %c0_i32_0 : i32, i32
  }
  func.func @transform_5(%arg0: i32) -> (i32, i32) {
    %c0_i32 = arith.constant 0 : i32
    %c0_i32_0 = arith.constant 0 : i32
    %c0_i32_1 = arith.constant 0 : i32
    return %c0_i32, %c0_i32_0 : i32, i32
  }
  func.func @transform_6(%arg0: i32) -> (i32, i32) {
    %c0_i32 = arith.constant 0 : i32
    %c0_i32_0 = arith.constant 0 : i32
    %c0_i32_1 = arith.constant 0 : i32
    return %c0_i32, %c0_i32_0 : i32, i32
  }
  func.func @transform_7(%arg0: i32) -> (i32, i32) {
    %c0_i32 = arith.constant 0 : i32
    %c0_i32_0 = arith.constant 0 : i32
    return %c0_i32, %arg0 : i32, i32
  }
}

module attributes {stable_mosaic.version = 11 : i64} {
  func.func @mlp_kernel(%arg0: i32, %arg1: memref<32x128xf32, #tpu.memory_space<vmem>>, %arg2: memref<64x32xbf16, #tpu.memory_space<vmem>>, %arg3: memref<64x1xf32, #tpu.memory_space<vmem>>, %arg4: memref<32x64xbf16, #tpu.memory_space<vmem>>, %arg5: memref<32x1xf32, #tpu.memory_space<vmem>>, %arg6: memref<8x32xbf16, #tpu.memory_space<vmem>>, %arg7: memref<8x1xf32, #tpu.memory_space<vmem>>, %arg8: memref<8x128xf32, #tpu.memory_space<vmem>>) attributes {dimension_semantics = [#tpu.dimension_semantics<parallel>], iteration_bounds = array<i64: 2>, scalar_prefetch = 0 : i64, scratch_operands = 0 : i64, tpu.core_type = #tpu.core_type<tc>, window_params = [{transform_indices = @transform_0, window_bounds = array<i64: 32, 128>}, {pipeline_mode = #tpu.pipeline_mode<synchronous>, transform_indices = @transform_1, window_bounds = array<i64: 64, 32>}, {pipeline_mode = #tpu.pipeline_mode<synchronous>, transform_indices = @transform_2, window_bounds = array<i64: 64, 1>}, {pipeline_mode = #tpu.pipeline_mode<synchronous>, transform_indices = @transform_3, window_bounds = array<i64: 32, 64>}, {pipeline_mode = #tpu.pipeline_mode<synchronous>, transform_indices = @transform_4, window_bounds = array<i64: 32, 1>}, {pipeline_mode = #tpu.pipeline_mode<synchronous>, transform_indices = @transform_5, window_bounds = array<i64: 8, 32>}, {pipeline_mode = #tpu.pipeline_mode<synchronous>, transform_indices = @transform_6, window_bounds = array<i64: 8, 1>}, {transform_indices = @transform_7, window_bounds = array<i64: 8, 128>}]} {
    %c0 = arith.constant 0 : index
    %c0_0 = arith.constant 0 : index
    %0 = vector.load %arg1[%c0, %c0_0] : memref<32x128xf32, #tpu.memory_space<vmem>>, vector<32x128xf32>
    %1 = arith.truncf %0 : vector<32x128xf32> to vector<32x128xbf16>
    %c0_1 = arith.constant 0 : index
    %c0_2 = arith.constant 0 : index
    %2 = vector.load %arg2[%c0_1, %c0_2] : memref<64x32xbf16, #tpu.memory_space<vmem>>, vector<64x32xbf16>
    %cst = arith.constant dense<0.000000e+00> : vector<64x128xf32>
    %3 = tpu.matmul %2, %1, %cst {dimension_numbers = #tpu.dot_dimension_numbers<[1], [0], [0], [1], [0, 0, 1, 1], [], []>} : vector<64x32xbf16>, vector<32x128xbf16>, vector<64x128xf32> -> vector<64x128xf32>
    %c0_3 = arith.constant 0 : index
    %c0_4 = arith.constant 0 : index
    %4 = vector.load %arg3[%c0_3, %c0_4] : memref<64x1xf32, #tpu.memory_space<vmem>>, vector<64x1xf32>
    %5 = vector.broadcast %4 : vector<64x1xf32> to vector<64x128xf32>
    %6 = arith.addf %3, %5 : vector<64x128xf32>
    %cst_5 = arith.constant 0.000000e+00 : f32
    %7 = vector.broadcast %cst_5 : f32 to vector<64x128xf32>
    %8 = arith.maximumf %6, %7 : vector<64x128xf32>
    %c0_6 = arith.constant 0 : index
    %c0_7 = arith.constant 0 : index
    %9 = vector.load %arg4[%c0_6, %c0_7] : memref<32x64xbf16, #tpu.memory_space<vmem>>, vector<32x64xbf16>
    %10 = arith.truncf %8 : vector<64x128xf32> to vector<64x128xbf16>
    %cst_8 = arith.constant dense<0.000000e+00> : vector<32x128xf32>
    %11 = tpu.matmul %9, %10, %cst_8 {dimension_numbers = #tpu.dot_dimension_numbers<[1], [0], [0], [1], [0, 0, 1, 1], [], []>} : vector<32x64xbf16>, vector<64x128xbf16>, vector<32x128xf32> -> vector<32x128xf32>
    %c0_9 = arith.constant 0 : index
    %c0_10 = arith.constant 0 : index
    %12 = vector.load %arg5[%c0_9, %c0_10] : memref<32x1xf32, #tpu.memory_space<vmem>>, vector<32x1xf32>
    %13 = vector.broadcast %12 : vector<32x1xf32> to vector<32x128xf32>
    %14 = arith.addf %11, %13 : vector<32x128xf32>
    %cst_11 = arith.constant 0.000000e+00 : f32
    %15 = vector.broadcast %cst_11 : f32 to vector<32x128xf32>
    %16 = arith.maximumf %14, %15 : vector<32x128xf32>
    %c0_12 = arith.constant 0 : index
    %c0_13 = arith.constant 0 : index
    %17 = vector.load %arg6[%c0_12, %c0_13] : memref<8x32xbf16, #tpu.memory_space<vmem>>, vector<8x32xbf16>
    %18 = arith.truncf %16 : vector<32x128xf32> to vector<32x128xbf16>
    %cst_14 = arith.constant dense<0.000000e+00> : vector<8x128xf32>
    %19 = tpu.matmul %17, %18, %cst_14 {dimension_numbers = #tpu.dot_dimension_numbers<[1], [0], [0], [1], [0, 0, 1, 1], [], []>} : vector<8x32xbf16>, vector<32x128xbf16>, vector<8x128xf32> -> vector<8x128xf32>
    %c0_15 = arith.constant 0 : index
    %c0_16 = arith.constant 0 : index
    %20 = vector.load %arg7[%c0_15, %c0_16] : memref<8x1xf32, #tpu.memory_space<vmem>>, vector<8x1xf32>
    %21 = vector.broadcast %20 : vector<8x1xf32> to vector<8x128xf32>
    %22 = arith.addf %19, %21 : vector<8x128xf32>
    %c0_17 = arith.constant 0 : index
    %c0_18 = arith.constant 0 : index
    %23 = vector.load %arg8[%c0_17, %c0_18] : memref<8x128xf32, #tpu.memory_space<vmem>>, vector<8x128xf32>
    tpu.vector_store %arg8[%c0_17, %c0_18], %22 {strides = array<i32>} : memref<8x128xf32, #tpu.memory_space<vmem>>, vector<8x128xf32>,
    return
  }
  func.func @transform_0(%arg0: i32) -> (i32, i32) {
    %c0_i32 = arith.constant 0 : i32
    %c0_i32_0 = arith.constant 0 : i32
    return %c0_i32, %arg0 : i32, i32
  }
  func.func @transform_1(%arg0: i32) -> (i32, i32) {
    %c0_i32 = arith.constant 0 : i32
    %c0_i32_0 = arith.constant 0 : i32
    %c0_i32_1 = arith.constant 0 : i32
    return %c0_i32, %c0_i32_0 : i32, i32
  }
  func.func @transform_2(%arg0: i32) -> (i32, i32) {
    %c0_i32 = arith.constant 0 : i32
    %c0_i32_0 = arith.constant 0 : i32
    %c0_i32_1 = arith.constant 0 : i32
    return %c0_i32, %c0_i32_0 : i32, i32
  }
  func.func @transform_3(%arg0: i32) -> (i32, i32) {
    %c0_i32 = arith.constant 0 : i32
    %c0_i32_0 = arith.constant 0 : i32
    %c0_i32_1 = arith.constant 0 : i32
    return %c0_i32, %c0_i32_0 : i32, i32
  }
  func.func @transform_4(%arg0: i32) -> (i32, i32) {
    %c0_i32 = arith.constant 0 : i32
    %c0_i32_0 = arith.constant 0 : i32
    %c0_i32_1 = arith.constant 0 : i32
    return %c0_i32, %c0_i32_0 : i32, i32
  }
  func.func @transform_5(%arg0: i32) -> (i32, i32) {
    %c0_i32 = arith.constant 0 : i32
    %c0_i32_0 = arith.constant 0 : i32
    %c0_i32_1 = arith.constant 0 : i32
    return %c0_i32, %c0_i32_0 : i32, i32
  }
  func.func @transform_6(%arg0: i32) -> (i32, i32) {
    %c0_i32 = arith.constant 0 : i32
    %c0_i32_0 = arith.constant 0 : i32
    %c0_i32_1 = arith.constant 0 : i32
    return %c0_i32, %c0_i32_0 : i32, i32
  }
  func.func @transform_7(%arg0: i32) -> (i32, i32) {
    %c0_i32 = arith.constant 0 : i32
    %c0_i32_0 = arith.constant 0 : i32
    return %c0_i32, %arg0 : i32, i32
  }
}

</mosaic_0001>

<llo_original>
// kernel: tpu_custom_call.1
$region0: #{tpu_custom_call.1}
  #allocation0 [shape = 'u32[]', space=smem, size = 0x4, offset = 0x4, fixed_abs, tag = 'smem constant byte address 0x4 - core index']
  #allocation1 [shape = 'u32[144,128]{1,0:T(1,128)}', space=vmem, size = 0x12000, scoped, tag = 'internal scratch']
  %s0 = inlined_call_operand.vmem [shape: f32[32,256], index: 0, kind: input, shape index: {}]
  %s1 = inlined_call_operand.vmem [shape: bf16[64,32], index: 1, kind: input, shape index: {}]
  %s2 = inlined_call_operand.vmem [shape: f32[64,1], index: 2, kind: input, shape index: {}]
  %s3 = inlined_call_operand.vmem [shape: bf16[32,64], index: 3, kind: input, shape index: {}]
  %s4 = inlined_call_operand.vmem [shape: f32[32,1], index: 4, kind: input, shape index: {}]
  %s5 = inlined_call_operand.vmem [shape: bf16[8,32], index: 5, kind: input, shape index: {}]
  %s6 = inlined_call_operand.vmem [shape: f32[8,1], index: 6, kind: input, shape index: {}]
  %s7 = inlined_call_operand.hbm [shape: f32[8,256], index: 7, kind: output, shape index: {}]
  %s8 = sld [smem:[#allocation0]]
  $region99: #{tpu_custom_call.1} parent=0
    _
  %s10 = ssub.s32 1, %s8
  %s11 = scalar_select 0, %s10, %s8
  $region1: #{tpu_custom_call.1} parent=0
    #allocation2 [shape = 'u8[32768]{0}', space=vmem, size = 0x8000, scoped, tag = 'input window, operand 0']
    #allocation3 [shape = 'u8[8192]{0}', space=vmem, size = 0x2000, scoped, tag = 'output window, operand 0']
    #allocation4 [shape = 's32[2]{0}', space=sflag, size = 0x8, scoped, tag = 'scoped memory for tpu_custom_call.1']
    %12 = vsyncpa [#allocation4], 0
    %s13 = scalar_lea.sflag [#allocation4], 1
    %14 = vsyncpa %s13, 0
    loop: start=0, step=1, limit=4
    $region2: #{tpu_custom_call.1} parent=1 // loop_pre_header
      _
    $region3: #{tpu_custom_call.1} parent=1 // loop_header
      %s16 = sphi 0, %s20
      %p17 = scmp.ge.s32.totalorder %s16, 4
      %s26 = sphi 0, %s28
      %s29 = sphi 0, %s26
      %s30 = sphi 0, %s29
      %s46 = sphi 0, %s30
      %s50 = sphi 0, %s50
      %s52 = sphi 0, %s50
      %s53 = sphi 0, %s52
      %s67 = sphi 0, %s53
      %s71 = sphi 0, %s71
      %s73 = sphi 0, %s71
      %s74 = sphi 0, %s73
      %s88 = sphi 0, %s74
      %s92 = sphi 0, %s92
      %s94 = sphi 0, %s92
      %s95 = sphi 0, %s94
      %s109 = sphi 0, %s95
      %s113 = sphi 0, %s113
      %s115 = sphi 0, %s113
      %s116 = sphi 0, %s115
      %s130 = sphi 0, %s116
      %s134 = sphi 0, %s134
      %s136 = sphi 0, %s134
      %s137 = sphi 0, %s136
      %s151 = sphi 0, %s137
      %s155 = sphi 0, %s155
      %s157 = sphi 0, %s155
      %s158 = sphi 0, %s157
      %s172 = sphi 0, %s158
      %s178 = sphi 0, %s180
      %s181 = sphi 0, %s178
      %s182 = sphi 0, %s181
      %s198 = sphi 0, %s182
    $region4: #{tpu_custom_call.1} parent=1 // loop_header_branch
      %19 = sbr.rel (%p17) target = $region8
    $region5: #{tpu_custom_call.1} parent=1 // loop_body
      %s21 = ssub.s32 %s16, 1
      %s22 = ssub.s32 %s16, 2
      %s23 = sadd.s32 %s16, 1
      %s24 = ssub.s32 %s16, %s23
      %p25 = scmp.eq.s32.totalorder %s24, 0
      %s27 = sadd.s32 %s26, 1
      %s28 = scalar_select %p25, %s26, %s27
      %p31 = pneg %p25
      %p32 = scmp.eq.s32.totalorder %s16, 1
      %p33 = por %p31, %p32
      %p34 = scmp.ne.s32.totalorder %s26, %s29
      %p35 = scmp.eq.s32.totalorder %s16, 0
      %p36 = por %p34, %p35
      %p37 = scmp.ne.s32.totalorder %s26, %s29
      %p38 = scmp.eq.s32.totalorder %s21, 1
      %p39 = por %p37, %p38
      %p40 = scmp.ne.s32.totalorder %s29, %s30
      %p41 = scmp.eq.s32.totalorder %s21, 0
      %p42 = por %p40, %p41
      %p43 = scmp.ne.s32.totalorder %s29, %s30
      %p44 = scmp.eq.s32.totalorder %s22, 1
      %p45 = por %p43, %p44
      %p47 = scmp.ne.s32.totalorder %s30, %s46
      %p48 = scmp.eq.s32.totalorder %s22, 0
      %p49 = por %p47, %p48
      %s51 = sadd.s32 %s50, 1
      %p54 = scmp.eq.s32.totalorder %s16, 1
      %p55 = scmp.ne.s32.totalorder %s50, %s52
      %p56 = scmp.eq.s32.totalorder %s16, 0
      %p57 = por %p55, %p56
      %p58 = scmp.ne.s32.totalorder %s50, %s52
      %p59 = scmp.eq.s32.totalorder %s21, 1
      %p60 = por %p58, %p59
      %p61 = scmp.ne.s32.totalorder %s52, %s53
      %p62 = scmp.eq.s32.totalorder %s21, 0
      %p63 = por %p61, %p62
      %p64 = scmp.ne.s32.totalorder %s52, %s53
      %p65 = scmp.eq.s32.totalorder %s22, 1
      %p66 = por %p64, %p65
      %p68 = scmp.ne.s32.totalorder %s53, %s67
      %p69 = scmp.eq.s32.totalorder %s22, 0
      %p70 = por %p68, %p69
      %s72 = sadd.s32 %s71, 1
      %p75 = scmp.eq.s32.totalorder %s16, 1
      %p76 = scmp.ne.s32.totalorder %s71, %s73
      %p77 = scmp.eq.s32.totalorder %s16, 0
      %p78 = por %p76, %p77
      %p79 = scmp.ne.s32.totalorder %s71, %s73
      %p80 = scmp.eq.s32.totalorder %s21, 1
      %p81 = por %p79, %p80
      %p82 = scmp.ne.s32.totalorder %s73, %s74
      %p83 = scmp.eq.s32.totalorder %s21, 0
      %p84 = por %p82, %p83
      %p85 = scmp.ne.s32.totalorder %s73, %s74
      %p86 = scmp.eq.s32.totalorder %s22, 1
      %p87 = por %p85, %p86
      %p89 = scmp.ne.s32.totalorder %s74, %s88
      %p90 = scmp.eq.s32.totalorder %s22, 0
      %p91 = por %p89, %p90
      %s93 = sadd.s32 %s92, 1
      %p96 = scmp.eq.s32.totalorder %s16, 1
      %p97 = scmp.ne.s32.totalorder %s92, %s94
      %p98 = scmp.eq.s32.totalorder %s16, 0
      %p99 = por %p97, %p98
      %p100 = scmp.ne.s32.totalorder %s92, %s94
      %p101 = scmp.eq.s32.totalorder %s21, 1
      %p102 = por %p100, %p101
      %p103 = scmp.ne.s32.totalorder %s94, %s95
      %p104 = scmp.eq.s32.totalorder %s21, 0
      %p105 = por %p103, %p104
      %p106 = scmp.ne.s32.totalorder %s94, %s95
      %p107 = scmp.eq.s32.totalorder %s22, 1
      %p108 = por %p106, %p107
      %p110 = scmp.ne.s32.totalorder %s95, %s109
      %p111 = scmp.eq.s32.totalorder %s22, 0
      %p112 = por %p110, %p111
      %s114 = sadd.s32 %s113, 1
      %p117 = scmp.eq.s32.totalorder %s16, 1
      %p118 = scmp.ne.s32.totalorder %s113, %s115
      %p119 = scmp.eq.s32.totalorder %s16, 0
      %p120 = por %p118, %p119
      %p121 = scmp.ne.s32.totalorder %s113, %s115
      %p122 = scmp.eq.s32.totalorder %s21, 1
      %p123 = por %p121, %p122
      %p124 = scmp.ne.s32.totalorder %s115, %s116
      %p125 = scmp.eq.s32.totalorder %s21, 0
      %p126 = por %p124, %p125
      %p127 = scmp.ne.s32.totalorder %s115, %s116
      %p128 = scmp.eq.s32.totalorder %s22, 1
      %p129 = por %p127, %p128
      %p131 = scmp.ne.s32.totalorder %s116, %s130
      %p132 = scmp.eq.s32.totalorder %s22, 0
      %p133 = por %p131, %p132
      %s135 = sadd.s32 %s134, 1
      %p138 = scmp.eq.s32.totalorder %s16, 1
      %p139 = scmp.ne.s32.totalorder %s134, %s136
      %p140 = scmp.eq.s32.totalorder %s16, 0
      %p141 = por %p139, %p140
      %p142 = scmp.ne.s32.totalorder %s134, %s136
      %p143 = scmp.eq.s32.totalorder %s21, 1
      %p144 = por %p142, %p143
      %p145 = scmp.ne.s32.totalorder %s136, %s137
      %p146 = scmp.eq.s32.totalorder %s21, 0
      %p147 = por %p145, %p146
      %p148 = scmp.ne.s32.totalorder %s136, %s137
      %p149 = scmp.eq.s32.totalorder %s22, 1
      %p150 = por %p148, %p149
      %p152 = scmp.ne.s32.totalorder %s137, %s151
      %p153 = scmp.eq.s32.totalorder %s22, 0
      %p154 = por %p152, %p153
      %s156 = sadd.s32 %s155, 1
      %p159 = scmp.eq.s32.totalorder %s16, 1
      %p160 = scmp.ne.s32.totalorder %s155, %s157
      %p161 = scmp.eq.s32.totalorder %s16, 0
      %p162 = por %p160, %p161
      %p163 = scmp.ne.s32.totalorder %s155, %s157
      %p164 = scmp.eq.s32.totalorder %s21, 1
      %p165 = por %p163, %p164
      %p166 = scmp.ne.s32.totalorder %s157, %s158
      %p167 = scmp.eq.s32.totalorder %s21, 0
      %p168 = por %p166, %p167
      %p169 = scmp.ne.s32.totalorder %s157, %s158
      %p170 = scmp.eq.s32.totalorder %s22, 1
      %p171 = por %p169, %p170
      %p173 = scmp.ne.s32.totalorder %s158, %s172
      %p174 = scmp.eq.s32.totalorder %s22, 0
      %p175 = por %p173, %p174
      %s176 = ssub.s32 %s16, %s23
      %p177 = scmp.eq.s32.totalorder %s176, 0
      %s179 = sadd.s32 %s178, 1
      %s180 = scalar_select %p177, %s178, %s179
      %p183 = pneg %p177
      %p184 = scmp.eq.s32.totalorder %s16, 1
      %p185 = por %p183, %p184
      %p186 = scmp.ne.s32.totalorder %s178, %s181
      %p187 = scmp.eq.s32.totalorder %s16, 0
      %p188 = por %p186, %p187
      %p189 = scmp.ne.s32.totalorder %s178, %s181
      %p190 = scmp.eq.s32.totalorder %s21, 1
      %p191 = por %p189, %p190
      %p192 = scmp.ne.s32.totalorder %s181, %s182
      %p193 = scmp.eq.s32.totalorder %s21, 0
      %p194 = por %p192, %p193
      %p195 = scmp.ne.s32.totalorder %s181, %s182
      %p196 = scmp.eq.s32.totalorder %s22, 1
      %p197 = por %p195, %p196
      %p199 = scmp.ne.s32.totalorder %s182, %s198
      %p200 = scmp.eq.s32.totalorder %s22, 0
      %p201 = por %p199, %p200
      %p202 = scmp.le.s32.totalorder 1, %s16
      %p203 = scmp.lt.s32.totalorder %s16, 3
      %p204 = pnand %p202, %p203
      %p205 = pneg %p204
      // Predicated region
      $region9: #{tpu_custom_call.1} parent=5 // pred_check
        _
      $region10: #{tpu_custom_call.1} parent=5 // pred_check_branch
        %207 = sbr.rel (%p204) target = $region12
      $region11: #{tpu_custom_call.1} parent=5 // pred_region
        %s208 = ssub.s32 %s16, 1
        // Predicated region
        $region13: #{tpu_custom_call.1} parent=11 // pred_check
          %p209 = pneg %p63
        $region14: #{tpu_custom_call.1} parent=11 // pred_check_branch
          %211 = sbr.rel (%p209) target = $region16
        $region15: #{tpu_custom_call.1} parent=11 // pred_region
          _
        $region16: #{tpu_custom_call.1} parent=11 // pred_fallthru
          _
        // Predicated region
        $region17: #{tpu_custom_call.1} parent=11 // pred_check
          %p212 = pneg %p84
        $region18: #{tpu_custom_call.1} parent=11 // pred_check_branch
          %214 = sbr.rel (%p212) target = $region20
        $region19: #{tpu_custom_call.1} parent=11 // pred_region
          _
        $region20: #{tpu_custom_call.1} parent=11 // pred_fallthru
          _
        // Predicated region
        $region21: #{tpu_custom_call.1} parent=11 // pred_check
          %p215 = pneg %p105
        $region22: #{tpu_custom_call.1} parent=11 // pred_check_branch
          %217 = sbr.rel (%p215) target = $region24
        $region23: #{tpu_custom_call.1} parent=11 // pred_region
          _
        $region24: #{tpu_custom_call.1} parent=11 // pred_fallthru
          _
        // Predicated region
        $region25: #{tpu_custom_call.1} parent=11 // pred_check
          %p218 = pneg %p126
        $region26: #{tpu_custom_call.1} parent=11 // pred_check_branch
          %220 = sbr.rel (%p218) target = $region28
        $region27: #{tpu_custom_call.1} parent=11 // pred_region
          _
        $region28: #{tpu_custom_call.1} parent=11 // pred_fallthru
          _
        // Predicated region
        $region29: #{tpu_custom_call.1} parent=11 // pred_check
          %p221 = pneg %p147
        $region30: #{tpu_custom_call.1} parent=11 // pred_check_branch
          %223 = sbr.rel (%p221) target = $region32
        $region31: #{tpu_custom_call.1} parent=11 // pred_region
          _
        $region32: #{tpu_custom_call.1} parent=11 // pred_fallthru
          _
        // Predicated region
        $region33: #{tpu_custom_call.1} parent=11 // pred_check
          %p224 = pneg %p168
        $region34: #{tpu_custom_call.1} parent=11 // pred_check_branch
          %226 = sbr.rel (%p224) target = $region36
        $region35: #{tpu_custom_call.1} parent=11 // pred_region
          _
        $region36: #{tpu_custom_call.1} parent=11 // pred_fallthru
          _
      $region12: #{tpu_custom_call.1} parent=5 // pred_fallthru
        _
      %p227 = scmp.lt.s32.totalorder %s16, 2
      // Predicated region
      $region37: #{tpu_custom_call.1} parent=5 // pred_check
        %p228 = pneg %p227
      $region38: #{tpu_custom_call.1} parent=5 // pred_check_branch
        %230 = sbr.rel (%p228) target = $region40
      $region39: #{tpu_custom_call.1} parent=5 // pred_region
        // Predicated region
        $region41: #{tpu_custom_call.1} parent=39 // pred_check
          %p231 = pneg %p36
        $region42: #{tpu_custom_call.1} parent=39 // pred_check_branch
          %233 = sbr.rel (%p231) target = $region44
        $region43: #{tpu_custom_call.1} parent=39 // pred_region
          %s234 = sand.u32 %s26, 1
          %s235 = sand.u32 %s26, 1
          %s236 = smul.addr %s235, 32
          %s237 = scalar_lea.vmem [#allocation2], %s236
          %s238 = smul.addr %s16, 8
          %s239 = scalar_lea.vmem %s0, %s238
          // Predicated region
          $region45: #{tpu_custom_call.1} parent=43 // pred_check
            _
          $region46: #{tpu_custom_call.1} parent=43 // pred_check_branch
            %241 = sbr.rel (0) target = $region48
          $region47: #{tpu_custom_call.1} parent=43 // pred_region
            // Predicated region
            $region49: #{tpu_custom_call.1} parent=47 // pred_check
              _
            $region50: #{tpu_custom_call.1} parent=47 // pred_check_branch
              %243 = sbr.rel (0) target = $region52
            $region51: #{tpu_custom_call.1} parent=47 // pred_region
              // Predicated region
              $region64: #{tpu_custom_call.1} parent=51 // pred_check
                _
              $region65: #{tpu_custom_call.1} parent=51 // pred_check_branch
                %265 = sbr.rel (0) target = $region67
              $region66: #{tpu_custom_call.1} parent=51 // pred_region
                loop: start=0, step=1, limit=1
                $region68: #{tpu_custom_call.1} parent=66 // loop_pre_header
                  _
                $region69: #{tpu_custom_call.1} parent=66 // loop_header
                  %s267 = sphi 0, %s271
                  %p268 = scmp.ge.s32.totalorder %s267, 1
                  %s272 = sphi %s239, %s239
                  %s273 = sphi %s237, %s237
                $region70: #{tpu_custom_call.1} parent=66 // loop_header_branch
                  %270 = sbr.rel (%p268) target = $region74
                $region71: #{tpu_custom_call.1} parent=66 // loop_body
                  %v274 = vld [vmem:[%s272] sm:$0xff]
                  %275 = vst [vmem:[%s273] sm:$0xff] %v274
                  %v276 = vld [vmem:[%s272 + $0x10] sm:$0xff]
                  %277 = vst [vmem:[%s273 + $0x8] sm:$0xff] %v276
                  %v278 = vld [vmem:[%s272 + $0x20] sm:$0xff]
                  %279 = vst [vmem:[%s273 + $0x10] sm:$0xff] %v278
                  %v280 = vld [vmem:[%s272 + $0x30] sm:$0xff]
                  %281 = vst [vmem:[%s273 + $0x18] sm:$0xff] %v280
                $region72: #{tpu_custom_call.1} parent=66 // loop_footer
                  %s271 = sadd.s32 1, %s267
                $region73: #{tpu_custom_call.1} parent=66 // loop_footer_branch
                  %266 = sbr.rel target = $region69
                $region74: #{tpu_custom_call.1} parent=66 // loop_exit
                  _
              $region67: #{tpu_custom_call.1} parent=51 // pred_fallthru
                _
              // Predicated region
              $region75: #{tpu_custom_call.1} parent=51 // pred_check
                _
              $region76: #{tpu_custom_call.1} parent=51 // pred_check_branch
                %283 = sbr.rel target = $region78
              $region77: #{tpu_custom_call.1} parent=51 // pred_region
                _
              $region78: #{tpu_custom_call.1} parent=51 // pred_fallthru
                _
            $region52: #{tpu_custom_call.1} parent=47 // pred_fallthru
              _
            // Predicated region
            $region53: #{tpu_custom_call.1} parent=47 // pred_check
              _
            $region54: #{tpu_custom_call.1} parent=47 // pred_check_branch
              %245 = sbr.rel target = $region56
            $region55: #{tpu_custom_call.1} parent=47 // pred_region
              %s247 = ssub.s32 256, 1
              loop: start=0, step=1, limit=1
              $region57: #{tpu_custom_call.1} parent=55 // loop_pre_header
                _
              $region58: #{tpu_custom_call.1} parent=55 // loop_header
                %s249 = sphi 0, %s253
                %p250 = scmp.ge.s32.totalorder %s249, 1
                %s254 = sphi %s239, %s239
                %s255 = sphi %s237, %s237
              $region59: #{tpu_custom_call.1} parent=55 // loop_header_branch
                %252 = sbr.rel (%p250) target = $region63
              $region60: #{tpu_custom_call.1} parent=55 // loop_body
                %v256 = vld [vmem:[%s254] sm:%s247]
                %257 = vst [vmem:[%s255] sm:%s247] %v256
                %v258 = vld [vmem:[%s254 + $0x10] sm:%s247]
                %259 = vst [vmem:[%s255 + $0x8] sm:%s247] %v258
                %v260 = vld [vmem:[%s254 + $0x20] sm:%s247]
                %261 = vst [vmem:[%s255 + $0x10] sm:%s247] %v260
                %v262 = vld [vmem:[%s254 + $0x30] sm:%s247]
                %263 = vst [vmem:[%s255 + $0x18] sm:%s247] %v262
              $region61: #{tpu_custom_call.1} parent=55 // loop_footer
                %s253 = sadd.s32 1, %s249
              $region62: #{tpu_custom_call.1} parent=55 // loop_footer_branch
                %248 = sbr.rel target = $region58
              $region63: #{tpu_custom_call.1} parent=55 // loop_exit
                _
            $region56: #{tpu_custom_call.1} parent=47 // pred_fallthru
              _
          $region48: #{tpu_custom_call.1} parent=43 // pred_fallthru
            _
          %284 = vnop
        $region44: #{tpu_custom_call.1} parent=39 // pred_fallthru
          _
      $region40: #{tpu_custom_call.1} parent=5 // pred_fallthru
        _
      %p285 = scmp.le.s32.totalorder 1, %s16
      %p286 = scmp.lt.s32.totalorder %s16, 3
      %p287 = pnand %p285, %p286
      %p288 = pneg %p287
      // Predicated region
      $region79: #{tpu_custom_call.1} parent=5 // pred_check
        _
      $region80: #{tpu_custom_call.1} parent=5 // pred_check_branch
        %290 = sbr.rel (%p287) target = $region82
      $region81: #{tpu_custom_call.1} parent=5 // pred_region
        %s291 = ssub.s32 %s16, 1
        %s292 = sand.u32 %s29, 1
        %s293 = sand.u32 %s29, 1
        %s294 = smul.addr %s293, 32
        %s295 = scalar_lea.vmem [#allocation2], %s294
        // Predicated region
        $region83: #{tpu_custom_call.1} parent=81 // pred_check
          %p296 = pneg %p42
        $region84: #{tpu_custom_call.1} parent=81 // pred_check_branch
          %298 = sbr.rel (%p296) target = $region86
        $region85: #{tpu_custom_call.1} parent=81 // pred_region
          _
        $region86: #{tpu_custom_call.1} parent=81 // pred_fallthru
          _
        %s299 = sand.u32 %s29, 1
        %s300 = sand.u32 %s29, 1
        %s301 = smul.addr %s300, 32
        %s302 = scalar_lea.vmem [#allocation2], %s301
        %p303 = pneg %p42
        %p304 = pneg %p39
        %p305 = pneg %p63
        %p306 = pneg %p60
        %p307 = pneg %p84
        %p308 = pneg %p81
        %p309 = pneg %p105
        %p310 = pneg %p102
        %p311 = pneg %p126
        %p312 = pneg %p123
        %p313 = pneg %p147
        %p314 = pneg %p144
        %p315 = pneg %p168
        %p316 = pneg %p165
        %p317 = pneg %p194
        %p318 = pneg %p191
        %s319 = sand.u32 %s181, 1
        %s320 = scalar_lea.sflag [#allocation4], %s319
        %s321 = sand.u32 %s181, 1
        %s322 = smul.addr %s321, 8
        %s323 = scalar_lea.vmem [#allocation3], %s322
        %v325 = vld [vmem:[%s295] sm:$0xff]
        %v326 = vld [vmem:[%s295 + $0x8] sm:$0xff]
        %v327 = vld [vmem:[%s295 + $0x10] sm:$0xff]
        %v328 = vld [vmem:[%s295 + $0x18] sm:$0xff]
        %v329 = vpack.c.bf16 %v326, %v325
        %v330 = vpack.c.bf16 %v328, %v327
        %v331 = vld [vmem:[%s1] sm:$0xf]
        %v332 = vld [vmem:[%s1 + $0x4] sm:$0xf]
        %v333 = vld [vmem:[%s1 + $0x8] sm:$0xf]
        %v334 = vld [vmem:[%s1 + $0xc] sm:$0xf]
        %v335 = vld [vmem:[%s1 + $0x10] sm:$0xf]
        %v336 = vld [vmem:[%s1 + $0x14] sm:$0xf]
        %v337 = vld [vmem:[%s1 + $0x18] sm:$0xf]
        %v338 = vld [vmem:[%s1 + $0x1c] sm:$0xf]
        %v339 = vld [vmem:[%s2] sm:$0xff]
        %v340 = vld [vmem:[%s2 + $0x8] sm:$0xff]
        %v341 = vld [vmem:[%s2 + $0x10] sm:$0xff]
        %v342 = vld [vmem:[%s2 + $0x18] sm:$0xff]
        %v343 = vld [vmem:[%s2 + $0x20] sm:$0xff]
        %v344 = vld [vmem:[%s2 + $0x28] sm:$0xff]
        %v345 = vld [vmem:[%s2 + $0x30] sm:$0xff]
        %v346 = vld [vmem:[%s2 + $0x38] sm:$0xff]
        %348 = vset.pattern.permute.xlu0 0
        %349 = vperm.xlu0 %348, %v339
        %v350 = vpop.permute.xlu0 %349
        %353 = vset.pattern.permute.xlu0 0
        %354 = vperm.xlu0 %353, %v340
        %v355 = vpop.permute.xlu0 %354
        %358 = vset.pattern.permute.xlu0 0
        %359 = vperm.xlu0 %358, %v341
        %v360 = vpop.permute.xlu0 %359
        %363 = vset.pattern.permute.xlu0 0
        %364 = vperm.xlu0 %363, %v342
        %v365 = vpop.permute.xlu0 %364
        %368 = vset.pattern.permute.xlu0 0
        %369 = vperm.xlu0 %368, %v343
        %v370 = vpop.permute.xlu0 %369
        %373 = vset.pattern.permute.xlu0 0
        %374 = vperm.xlu0 %373, %v344
        %v375 = vpop.permute.xlu0 %374
        %378 = vset.pattern.permute.xlu0 0
        %379 = vperm.xlu0 %378, %v345
        %v380 = vpop.permute.xlu0 %379
        %383 = vset.pattern.permute.xlu0 0
        %384 = vperm.xlu0 %383, %v346
        %v385 = vpop.permute.xlu0 %384
        %v395 = vunpack.c.l.b16 %v331
        %v396 = vunpack.c.l.b16 %v332
        %v397 = vunpack.c.l.b16 %v333
        %v398 = vunpack.c.l.b16 %v334
        %v399 = vunpack.c.l.b16 %v335
        %v400 = vunpack.c.l.b16 %v336
        %v401 = vunpack.c.l.b16 %v337
        %v402 = vunpack.c.l.b16 %v338
        %v403 = vpack.c.b16 %v396, %v395
        %v404 = vpack.c.b16 %v398, %v397
        %v405 = vpack.c.b16 %v400, %v399
        %v406 = vpack.c.b16 %v402, %v401
        %vm407 = vcmask 261120
        %v409 = vsel %vm407, %v403, 0
        %v412 = vsel %vm407, %v404, 0
        %v415 = vsel %vm407, %v405, 0
        %v418 = vsel %vm407, %v406, 0
        %420 = vmatprep.subr.bf16.mxu0 0
        %421 = vmatpush1.bf16.msra.mxu0 0
        %422 = vmatprep.subr.bf16.mxu0 0
        %423 = vmatpush1.bf16.msra.mxu0 0
        %424 = vmatprep.subr.bf16.mxu0 0
        %425 = vmatpush1.bf16.msra.mxu0 0
        %426 = vmatprep.subr.bf16.mxu0 0
        %427 = vmatpush1.bf16.msra.mxu0 0
        %428 = vmatprep.subr.bf16.mxu0 0
        %429 = vmatpush1.bf16.msra.mxu0 0
        %430 = vmatprep.subr.bf16.mxu0 0
        %431 = vmatpush1.bf16.msra.mxu0 0
        %432 = vmatprep.subr.bf16.mxu0 0
        %433 = vmatpush1.bf16.msra.mxu0 %v330
        %434 = vmatprep.subr.bf16.mxu0 0
        %435 = vmatpush1.bf16.msra.mxu0 %v329
        %436 = vmatprep.subr.bf16.mxu0 0
        %437 = vmatpush2.bf16.msra.mxu0 0
        %438 = vmatprep.subr.bf16.mxu0 0
        %439 = vmatpush2.bf16.msra.mxu0 0
        %440 = vmatprep.subr.bf16.mxu0 0
        %441 = vmatpush2.bf16.msra.mxu0 0
        %442 = vmatprep.subr.bf16.mxu0 0
        %443 = vmatpush2.bf16.msra.mxu0 0
        %444 = vmatprep.subr.bf16.mxu0 0
        %445 = vmatpush2.bf16.msra.mxu0 0
        %446 = vmatprep.subr.bf16.mxu0 0
        %447 = vmatpush2.bf16.msra.mxu0 0
        %448 = vmatprep.subr.bf16.mxu0 0
        %449 = vmatpush2.bf16.msra.mxu0 0
        %450 = vmatprep.subr.bf16.mxu0 0
        %451 = vmatpush2.bf16.msra.mxu0 0
        %452 = vmatprep.mubr.bf16.mxu0 0
        %453 = vmatmul.mubr.bf16.gmra.mxu0 %v409
        %v454 = vpop.f32.mrf.mxu0
        %v455 = vadd.f32 %v350, %v454
        %v456 = vpop.f32.mrf.mxu0
        %v457 = vpop.f32.mrf.mxu0
        %v458 = vadd.f32 %v355, %v457
        %v459 = vpop.f32.mrf.mxu0
        %460 = vmatprep.mubr.bf16.mxu0 0
        %461 = vmatmul.mubr.bf16.gmra.mxu0 %v412
        %v462 = vpop.f32.mrf.mxu0
        %v463 = vadd.f32 %v360, %v462
        %v464 = vpop.f32.mrf.mxu0
        %v465 = vpop.f32.mrf.mxu0
        %v466 = vadd.f32 %v365, %v465
        %v467 = vpop.f32.mrf.mxu0
        %468 = vmatprep.mubr.bf16.mxu0 0
        %469 = vmatmul.mubr.bf16.gmra.mxu0 %v415
        %v470 = vpop.f32.mrf.mxu0
        %v471 = vadd.f32 %v370, %v470
        %v472 = vpop.f32.mrf.mxu0
        %v473 = vpop.f32.mrf.mxu0
        %v474 = vadd.f32 %v375, %v473
        %v475 = vpop.f32.mrf.mxu0
        %476 = vmatprep.mubr.bf16.mxu0 0
        %477 = vmatmul.mubr.bf16.gmra.mxu0 %v418
        %v478 = vpop.f32.mrf.mxu0
        %v479 = vadd.f32 %v380, %v478
        %v480 = vpop.f32.mrf.mxu0
        %v481 = vpop.f32.mrf.mxu0
        %v482 = vadd.f32 %v385, %v481
        %v483 = vpop.f32.mrf.mxu0
        %484 = vdwg.mxu0
        %v485 = vmax.f32 %v455, 0.0
        %v486 = vmax.f32 %v458, 0.0
        %v487 = vmax.f32 %v463, 0.0
        %v488 = vmax.f32 %v466, 0.0
        %v489 = vmax.f32 %v471, 0.0
        %v490 = vmax.f32 %v474, 0.0
        %v491 = vmax.f32 %v479, 0.0
        %v492 = vmax.f32 %v482, 0.0
        %v493 = vld [vmem:[%s3] sm:$0xf]
        %v494 = vld [vmem:[%s3 + $0x4] sm:$0xf]
        %v495 = vld [vmem:[%s3 + $0x8] sm:$0xf]
        %v496 = vld [vmem:[%s3 + $0xc] sm:$0xf]
        %v497 = vpack.c.bf16 %v486, %v485
        %v498 = vpack.c.bf16 %v488, %v487
        %v499 = vpack.c.bf16 %v490, %v489
        %v500 = vpack.c.bf16 %v492, %v491
        %v501 = vld [vmem:[%s4] sm:$0xff]
        %v502 = vld [vmem:[%s4 + $0x8] sm:$0xff]
        %v503 = vld [vmem:[%s4 + $0x10] sm:$0xff]
        %v504 = vld [vmem:[%s4 + $0x18] sm:$0xff]
        %506 = vset.pattern.permute.xlu0 0
        %507 = vperm.xlu0 %506, %v501
        %v508 = vpop.permute.xlu0 %507
        %511 = vset.pattern.permute.xlu0 0
        %512 = vperm.xlu0 %511, %v502
        %v513 = vpop.permute.xlu0 %512
        %516 = vset.pattern.permute.xlu0 0
        %517 = vperm.xlu0 %516, %v503
        %v518 = vpop.permute.xlu0 %517
        %521 = vset.pattern.permute.xlu0 0
        %522 = vperm.xlu0 %521, %v504
        %v523 = vpop.permute.xlu0 %522
        %v529 = vunpack.c.l.b16 %v493
        %v530 = vunpack.c.l.b16 %v494
        %v531 = vunpack.c.l.b16 %v495
        %v532 = vunpack.c.l.b16 %v496
        %v533 = vpack.c.b16 %v530, %v529
        %v534 = vpack.c.b16 %v532, %v531
        %vm535 = vcmask 523264
        %v537 = vsel %vm535, %v533, 0
        %v540 = vsel %vm535, %v534, 0
        %542 = vmatprep.subr.bf16.mxu0 0
        %543 = vmatpush1.bf16.msra.mxu0 0
        %544 = vmatprep.subr.bf16.mxu0 0
        %545 = vmatpush1.bf16.msra.mxu0 0
        %546 = vmatprep.subr.bf16.mxu0 0
        %547 = vmatpush1.bf16.msra.mxu0 0
        %548 = vmatprep.subr.bf16.mxu0 0
        %549 = vmatpush1.bf16.msra.mxu0 0
        %550 = vmatprep.subr.bf16.mxu0 0
        %551 = vmatpush1.bf16.msra.mxu0 %v500
        %552 = vmatprep.subr.bf16.mxu0 0
        %553 = vmatpush1.bf16.msra.mxu0 %v499
        %554 = vmatprep.subr.bf16.mxu0 0
        %555 = vmatpush1.bf16.msra.mxu0 %v498
        %556 = vmatprep.subr.bf16.mxu0 0
        %557 = vmatpush1.bf16.msra.mxu0 %v497
        %558 = vmatprep.subr.bf16.mxu0 0
        %559 = vmatpush2.bf16.msra.mxu0 0
        %560 = vmatprep.subr.bf16.mxu0 0
        %561 = vmatpush2.bf16.msra.mxu0 0
        %562 = vmatprep.subr.bf16.mxu0 0
        %563 = vmatpush2.bf16.msra.mxu0 0
        %564 = vmatprep.subr.bf16.mxu0 0
        %565 = vmatpush2.bf16.msra.mxu0 0
        %566 = vmatprep.subr.bf16.mxu0 0
        %567 = vmatpush2.bf16.msra.mxu0 0
        %568 = vmatprep.subr.bf16.mxu0 0
        %569 = vmatpush2.bf16.msra.mxu0 0
        %570 = vmatprep.subr.bf16.mxu0 0
        %571 = vmatpush2.bf16.msra.mxu0 0
        %572 = vmatprep.subr.bf16.mxu0 0
        %573 = vmatpush2.bf16.msra.mxu0 0
        %574 = vmatprep.mubr.bf16.mxu0 0
        %575 = vmatmul.mubr.bf16.gmra.mxu0 %v537
        %v576 = vpop.f32.mrf.mxu0
        %v577 = vadd.f32 %v508, %v576
        %v578 = vpop.f32.mrf.mxu0
        %v579 = vpop.f32.mrf.mxu0
        %v580 = vadd.f32 %v513, %v579
        %v581 = vpop.f32.mrf.mxu0
        %582 = vmatprep.mubr.bf16.mxu0 0
        %583 = vmatmul.mubr.bf16.gmra.mxu0 %v540
        %v584 = vpop.f32.mrf.mxu0
        %v585 = vadd.f32 %v518, %v584
        %v586 = vpop.f32.mrf.mxu0
        %v587 = vpop.f32.mrf.mxu0
        %v588 = vadd.f32 %v523, %v587
        %v589 = vpop.f32.mrf.mxu0
        %590 = vdwg.mxu0
        %v591 = vmax.f32 %v577, 0.0
        %v592 = vmax.f32 %v580, 0.0
        %v593 = vmax.f32 %v585, 0.0
        %v594 = vmax.f32 %v588, 0.0
        %v595 = vld [vmem:[%s5] sm:$0xf]
        %v596 = vpack.c.bf16 %v592, %v591
        %v597 = vpack.c.bf16 %v594, %v593
        %v598 = vld [vmem:[%s6] sm:$0xff]
        %600 = vset.pattern.permute.xlu0 0
        %601 = vperm.xlu0 %600, %v598
        %v602 = vpop.permute.xlu0 %601
        %v605 = vsel %vm407, %v595, 0
        %607 = vmatprep.subr.bf16.mxu0 0
        %608 = vmatpush1.bf16.msra.mxu0 0
        %609 = vmatprep.subr.bf16.mxu0 0
        %610 = vmatpush1.bf16.msra.mxu0 0
        %611 = vmatprep.subr.bf16.mxu0 0
        %612 = vmatpush1.bf16.msra.mxu0 0
        %613 = vmatprep.subr.bf16.mxu0 0
        %614 = vmatpush1.bf16.msra.mxu0 0
        %615 = vmatprep.subr.bf16.mxu0 0
        %616 = vmatpush1.bf16.msra.mxu0 0
        %617 = vmatprep.subr.bf16.mxu0 0
        %618 = vmatpush1.bf16.msra.mxu0 0
        %619 = vmatprep.subr.bf16.mxu0 0
        %620 = vmatpush1.bf16.msra.mxu0 %v597
        %621 = vmatprep.subr.bf16.mxu0 0
        %622 = vmatpush1.bf16.msra.mxu0 %v596
        %623 = vmatprep.subr.bf16.mxu0 0
        %624 = vmatpush2.bf16.msra.mxu0 0
        %625 = vmatprep.subr.bf16.mxu0 0
        %626 = vmatpush2.bf16.msra.mxu0 0
        %627 = vmatprep.subr.bf16.mxu0 0
        %628 = vmatpush2.bf16.msra.mxu0 0
        %629 = vmatprep.subr.bf16.mxu0 0
        %630 = vmatpush2.bf16.msra.mxu0 0
        %631 = vmatprep.subr.bf16.mxu0 0
        %632 = vmatpush2.bf16.msra.mxu0 0
        %633 = vmatprep.subr.bf16.mxu0 0
        %634 = vmatpush2.bf16.msra.mxu0 0
        %635 = vmatprep.subr.bf16.mxu0 0
        %636 = vmatpush2.bf16.msra.mxu0 0
        %637 = vmatprep.subr.bf16.mxu0 0
        %638 = vmatpush2.bf16.msra.mxu0 0
        %639 = vmatprep.mubr.bf16.mxu0 0
        %640 = vmatmul.mubr.bf16.gmra.mxu0 %v605
        %v641 = vpop.f32.mrf.mxu0
        %v642 = vadd.f32 %v602, %v641
        %v643 = vpop.f32.mrf.mxu0
        %v644 = vpop.f32.mrf.mxu0
        %v645 = vpop.f32.mrf.mxu0
        %646 = vdwg.mxu0
        %647 = vst [vmem:[%s323] sm:$0xff] %v642
        %s648 = sand.u32 %s181, 1
        %s649 = scalar_lea.sflag [#allocation4], %s648
        %s650 = sand.u32 %s181, 1
        %s651 = smul.addr %s650, 8
        %s652 = scalar_lea.vmem [#allocation3], %s651
        // Predicated region
        $region87: #{tpu_custom_call.1} parent=81 // pred_check
          %p653 = pneg %p191
        $region88: #{tpu_custom_call.1} parent=81 // pred_check_branch
          %655 = sbr.rel (%p653) target = $region90
        $region89: #{tpu_custom_call.1} parent=81 // pred_region
          %s657 = ssub.s32 128, 128
          %658 = vsyncadd %s649, %s657
          %s659 = smul.addr %s21, 128
          %s660 = scalar_lea.hbm %s7, %s659
          %s662 = sshll.u32 %s652, 4
          %s663 = int_to_ptr.vmem [resolvable:$true] %s662
          %665 = dma.vmem_to_hbm [thread:$0]  %s663, 128, %s660, %s649
        $region90: #{tpu_custom_call.1} parent=81 // pred_fallthru
          _
      $region82: #{tpu_custom_call.1} parent=5 // pred_fallthru
        _
      %p666 = scmp.le.s32.totalorder 2, %s16
      // Predicated region
      $region91: #{tpu_custom_call.1} parent=5 // pred_check
        %p667 = pneg %p666
      $region92: #{tpu_custom_call.1} parent=5 // pred_check_branch
        %669 = sbr.rel (%p667) target = $region94
      $region93: #{tpu_custom_call.1} parent=5 // pred_region
        %s670 = ssub.s32 %s16, 2
        // Predicated region
        $region95: #{tpu_custom_call.1} parent=93 // pred_check
          %p671 = pneg %p197
        $region96: #{tpu_custom_call.1} parent=93 // pred_check_branch
          %673 = sbr.rel (%p671) target = $region98
        $region97: #{tpu_custom_call.1} parent=93 // pred_region
          %s674 = sand.u32 %s182, 1
          %s675 = scalar_lea.sflag [#allocation4], %s674
          %s676 = sand.u32 %s182, 1
          %s677 = smul.addr %s676, 8
          %s678 = scalar_lea.vmem [#allocation3], %s677
          %679 = dma.done %s675, 128
        $region98: #{tpu_custom_call.1} parent=93 // pred_fallthru
          _
      $region94: #{tpu_custom_call.1} parent=5 // pred_fallthru
        _
    $region6: #{tpu_custom_call.1} parent=1 // loop_footer
      %s20 = sadd.s32 1, %s16
    $region7: #{tpu_custom_call.1} parent=1 // loop_footer_branch
      %15 = sbr.rel target = $region3
    $region8: #{tpu_custom_call.1} parent=1 // loop_exit
      _
    %680 = vsyncpa [#allocation4], 1
    %s681 = scalar_lea.sflag [#allocation4], 1
    %682 = vsyncpa %s681, 1

// kernel: tpu_custom_call.1
$region0: #{tpu_custom_call.1}
  #allocation0 [shape = 'u32[]', space=smem, size = 0x4, offset = 0x4, fixed_abs, tag = 'smem constant byte address 0x4 - core index']
  #allocation1 [shape = 'u32[144,128]{1,0:T(1,128)}', space=vmem, size = 0x12000, scoped, tag = 'internal scratch']
  %s0 = inlined_call_operand.vmem [shape: f32[32,256], index: 0, kind: input, shape index: {}]
  %s1 = inlined_call_operand.vmem [shape: bf16[64,32], index: 1, kind: input, shape index: {}]
  %s2 = inlined_call_operand.vmem [shape: f32[64,1], index: 2, kind: input, shape index: {}]
  %s3 = inlined_call_operand.vmem [shape: bf16[32,64], index: 3, kind: input, shape index: {}]
  %s4 = inlined_call_operand.vmem [shape: f32[32,1], index: 4, kind: input, shape index: {}]
  %s5 = inlined_call_operand.vmem [shape: bf16[8,32], index: 5, kind: input, shape index: {}]
  %s6 = inlined_call_operand.vmem [shape: f32[8,1], index: 6, kind: input, shape index: {}]
  %s7 = inlined_call_operand.hbm [shape: f32[8,256], index: 7, kind: output, shape index: {}]
  %s8 = sld [smem:[#allocation0]]
  $region99: #{tpu_custom_call.1} parent=0
    _
  %s10 = ssub.s32 1, %s8
  %s11 = scalar_select 0, %s10, %s8
  $region1: #{tpu_custom_call.1} parent=0
    #allocation2 [shape = 'u8[32768]{0}', space=vmem, size = 0x8000, scoped, tag = 'input window, operand 0']
    #allocation3 [shape = 'u8[8192]{0}', space=vmem, size = 0x2000, scoped, tag = 'output window, operand 0']
    #allocation4 [shape = 's32[2]{0}', space=sflag, size = 0x8, scoped, tag = 'scoped memory for tpu_custom_call.1']
    %12 = vsyncpa [#allocation4], 0
    %s13 = scalar_lea.sflag [#allocation4], 1
    %14 = vsyncpa %s13, 0
    loop: start=0, step=1, limit=4
    $region2: #{tpu_custom_call.1} parent=1 // loop_pre_header
      _
    $region3: #{tpu_custom_call.1} parent=1 // loop_header
      %s16 = sphi 0, %s20
      %p17 = scmp.ge.s32.totalorder %s16, 4
      %s26 = sphi 0, %s28
      %s29 = sphi 0, %s26
      %s30 = sphi 0, %s29
      %s46 = sphi 0, %s30
      %s50 = sphi 0, %s50
      %s52 = sphi 0, %s50
      %s53 = sphi 0, %s52
      %s67 = sphi 0, %s53
      %s71 = sphi 0, %s71
      %s73 = sphi 0, %s71
      %s74 = sphi 0, %s73
      %s88 = sphi 0, %s74
      %s92 = sphi 0, %s92
      %s94 = sphi 0, %s92
      %s95 = sphi 0, %s94
      %s109 = sphi 0, %s95
      %s113 = sphi 0, %s113
      %s115 = sphi 0, %s113
      %s116 = sphi 0, %s115
      %s130 = sphi 0, %s116
      %s134 = sphi 0, %s134
      %s136 = sphi 0, %s134
      %s137 = sphi 0, %s136
      %s151 = sphi 0, %s137
      %s155 = sphi 0, %s155
      %s157 = sphi 0, %s155
      %s158 = sphi 0, %s157
      %s172 = sphi 0, %s158
      %s178 = sphi 0, %s180
      %s181 = sphi 0, %s178
      %s182 = sphi 0, %s181
      %s198 = sphi 0, %s182
    $region4: #{tpu_custom_call.1} parent=1 // loop_header_branch
      %19 = sbr.rel (%p17) target = $region8
    $region5: #{tpu_custom_call.1} parent=1 // loop_body
      %s21 = ssub.s32 %s16, 1
      %s22 = ssub.s32 %s16, 2
      %s23 = sadd.s32 %s16, 1
      %s24 = ssub.s32 %s16, %s23
      %p25 = scmp.eq.s32.totalorder %s24, 0
      %s27 = sadd.s32 %s26, 1
      %s28 = scalar_select %p25, %s26, %s27
      %p31 = pneg %p25
      %p32 = scmp.eq.s32.totalorder %s16, 1
      %p33 = por %p31, %p32
      %p34 = scmp.ne.s32.totalorder %s26, %s29
      %p35 = scmp.eq.s32.totalorder %s16, 0
      %p36 = por %p34, %p35
      %p37 = scmp.ne.s32.totalorder %s26, %s29
      %p38 = scmp.eq.s32.totalorder %s21, 1
      %p39 = por %p37, %p38
      %p40 = scmp.ne.s32.totalorder %s29, %s30
      %p41 = scmp.eq.s32.totalorder %s21, 0
      %p42 = por %p40, %p41
      %p43 = scmp.ne.s32.totalorder %s29, %s30
      %p44 = scmp.eq.s32.totalorder %s22, 1
      %p45 = por %p43, %p44
      %p47 = scmp.ne.s32.totalorder %s30, %s46
      %p48 = scmp.eq.s32.totalorder %s22, 0
      %p49 = por %p47, %p48
      %s51 = sadd.s32 %s50, 1
      %p54 = scmp.eq.s32.totalorder %s16, 1
      %p55 = scmp.ne.s32.totalorder %s50, %s52
      %p56 = scmp.eq.s32.totalorder %s16, 0
      %p57 = por %p55, %p56
      %p58 = scmp.ne.s32.totalorder %s50, %s52
      %p59 = scmp.eq.s32.totalorder %s21, 1
      %p60 = por %p58, %p59
      %p61 = scmp.ne.s32.totalorder %s52, %s53
      %p62 = scmp.eq.s32.totalorder %s21, 0
      %p63 = por %p61, %p62
      %p64 = scmp.ne.s32.totalorder %s52, %s53
      %p65 = scmp.eq.s32.totalorder %s22, 1
      %p66 = por %p64, %p65
      %p68 = scmp.ne.s32.totalorder %s53, %s67
      %p69 = scmp.eq.s32.totalorder %s22, 0
      %p70 = por %p68, %p69
      %s72 = sadd.s32 %s71, 1
      %p75 = scmp.eq.s32.totalorder %s16, 1
      %p76 = scmp.ne.s32.totalorder %s71, %s73
      %p77 = scmp.eq.s32.totalorder %s16, 0
      %p78 = por %p76, %p77
      %p79 = scmp.ne.s32.totalorder %s71, %s73
      %p80 = scmp.eq.s32.totalorder %s21, 1
      %p81 = por %p79, %p80
      %p82 = scmp.ne.s32.totalorder %s73, %s74
      %p83 = scmp.eq.s32.totalorder %s21, 0
      %p84 = por %p82, %p83
      %p85 = scmp.ne.s32.totalorder %s73, %s74
      %p86 = scmp.eq.s32.totalorder %s22, 1
      %p87 = por %p85, %p86
      %p89 = scmp.ne.s32.totalorder %s74, %s88
      %p90 = scmp.eq.s32.totalorder %s22, 0
      %p91 = por %p89, %p90
      %s93 = sadd.s32 %s92, 1
      %p96 = scmp.eq.s32.totalorder %s16, 1
      %p97 = scmp.ne.s32.totalorder %s92, %s94
      %p98 = scmp.eq.s32.totalorder %s16, 0
      %p99 = por %p97, %p98
      %p100 = scmp.ne.s32.totalorder %s92, %s94
      %p101 = scmp.eq.s32.totalorder %s21, 1
      %p102 = por %p100, %p101
      %p103 = scmp.ne.s32.totalorder %s94, %s95
      %p104 = scmp.eq.s32.totalorder %s21, 0
      %p105 = por %p103, %p104
      %p106 = scmp.ne.s32.totalorder %s94, %s95
      %p107 = scmp.eq.s32.totalorder %s22, 1
      %p108 = por %p106, %p107
      %p110 = scmp.ne.s32.totalorder %s95, %s109
      %p111 = scmp.eq.s32.totalorder %s22, 0
      %p112 = por %p110, %p111
      %s114 = sadd.s32 %s113, 1
      %p117 = scmp.eq.s32.totalorder %s16, 1
      %p118 = scmp.ne.s32.totalorder %s113, %s115
      %p119 = scmp.eq.s32.totalorder %s16, 0
      %p120 = por %p118, %p119
      %p121 = scmp.ne.s32.totalorder %s113, %s115
      %p122 = scmp.eq.s32.totalorder %s21, 1
      %p123 = por %p121, %p122
      %p124 = scmp.ne.s32.totalorder %s115, %s116
      %p125 = scmp.eq.s32.totalorder %s21, 0
      %p126 = por %p124, %p125
      %p127 = scmp.ne.s32.totalorder %s115, %s116
      %p128 = scmp.eq.s32.totalorder %s22, 1
      %p129 = por %p127, %p128
      %p131 = scmp.ne.s32.totalorder %s116, %s130
      %p132 = scmp.eq.s32.totalorder %s22, 0
      %p133 = por %p131, %p132
      %s135 = sadd.s32 %s134, 1
      %p138 = scmp.eq.s32.totalorder %s16, 1
      %p139 = scmp.ne.s32.totalorder %s134, %s136
      %p140 = scmp.eq.s32.totalorder %s16, 0
      %p141 = por %p139, %p140
      %p142 = scmp.ne.s32.totalorder %s134, %s136
      %p143 = scmp.eq.s32.totalorder %s21, 1
      %p144 = por %p142, %p143
      %p145 = scmp.ne.s32.totalorder %s136, %s137
      %p146 = scmp.eq.s32.totalorder %s21, 0
      %p147 = por %p145, %p146
      %p148 = scmp.ne.s32.totalorder %s136, %s137
      %p149 = scmp.eq.s32.totalorder %s22, 1
      %p150 = por %p148, %p149
      %p152 = scmp.ne.s32.totalorder %s137, %s151
      %p153 = scmp.eq.s32.totalorder %s22, 0
      %p154 = por %p152, %p153
      %s156 = sadd.s32 %s155, 1
      %p159 = scmp.eq.s32.totalorder %s16, 1
      %p160 = scmp.ne.s32.totalorder %s155, %s157
      %p161 = scmp.eq.s32.totalorder %s16, 0
      %p162 = por %p160, %p161
      %p163 = scmp.ne.s32.totalorder %s155, %s157
      %p164 = scmp.eq.s32.totalorder %s21, 1
      %p165 = por %p163, %p164
      %p166 = scmp.ne.s32.totalorder %s157, %s158
      %p167 = scmp.eq.s32.totalorder %s21, 0
      %p168 = por %p166, %p167
      %p169 = scmp.ne.s32.totalorder %s157, %s158
      %p170 = scmp.eq.s32.totalorder %s22, 1
      %p171 = por %p169, %p170
      %p173 = scmp.ne.s32.totalorder %s158, %s172
      %p174 = scmp.eq.s32.totalorder %s22, 0
      %p175 = por %p173, %p174
      %s176 = ssub.s32 %s16, %s23
      %p177 = scmp.eq.s32.totalorder %s176, 0
      %s179 = sadd.s32 %s178, 1
      %s180 = scalar_select %p177, %s178, %s179
      %p183 = pneg %p177
      %p184 = scmp.eq.s32.totalorder %s16, 1
      %p185 = por %p183, %p184
      %p186 = scmp.ne.s32.totalorder %s178, %s181
      %p187 = scmp.eq.s32.totalorder %s16, 0
      %p188 = por %p186, %p187
      %p189 = scmp.ne.s32.totalorder %s178, %s181
      %p190 = scmp.eq.s32.totalorder %s21, 1
      %p191 = por %p189, %p190
      %p192 = scmp.ne.s32.totalorder %s181, %s182
      %p193 = scmp.eq.s32.totalorder %s21, 0
      %p194 = por %p192, %p193
      %p195 = scmp.ne.s32.totalorder %s181, %s182
      %p196 = scmp.eq.s32.totalorder %s22, 1
      %p197 = por %p195, %p196
      %p199 = scmp.ne.s32.totalorder %s182, %s198
      %p200 = scmp.eq.s32.totalorder %s22, 0
      %p201 = por %p199, %p200
      %p202 = scmp.le.s32.totalorder 1, %s16
      %p203 = scmp.lt.s32.totalorder %s16, 3
      %p204 = pnand %p202, %p203
      %p205 = pneg %p204
      // Predicated region
      $region9: #{tpu_custom_call.1} parent=5 // pred_check
        _
      $region10: #{tpu_custom_call.1} parent=5 // pred_check_branch
        %207 = sbr.rel (%p204) target = $region12
      $region11: #{tpu_custom_call.1} parent=5 // pred_region
        %s208 = ssub.s32 %s16, 1
        // Predicated region
        $region13: #{tpu_custom_call.1} parent=11 // pred_check
          %p209 = pneg %p63
        $region14: #{tpu_custom_call.1} parent=11 // pred_check_branch
          %211 = sbr.rel (%p209) target = $region16
        $region15: #{tpu_custom_call.1} parent=11 // pred_region
          _
        $region16: #{tpu_custom_call.1} parent=11 // pred_fallthru
          _
        // Predicated region
        $region17: #{tpu_custom_call.1} parent=11 // pred_check
          %p212 = pneg %p84
        $region18: #{tpu_custom_call.1} parent=11 // pred_check_branch
          %214 = sbr.rel (%p212) target = $region20
        $region19: #{tpu_custom_call.1} parent=11 // pred_region
          _
        $region20: #{tpu_custom_call.1} parent=11 // pred_fallthru
          _
        // Predicated region
        $region21: #{tpu_custom_call.1} parent=11 // pred_check
          %p215 = pneg %p105
        $region22: #{tpu_custom_call.1} parent=11 // pred_check_branch
          %217 = sbr.rel (%p215) target = $region24
        $region23: #{tpu_custom_call.1} parent=11 // pred_region
          _
        $region24: #{tpu_custom_call.1} parent=11 // pred_fallthru
          _
        // Predicated region
        $region25: #{tpu_custom_call.1} parent=11 // pred_check
          %p218 = pneg %p126
        $region26: #{tpu_custom_call.1} parent=11 // pred_check_branch
          %220 = sbr.rel (%p218) target = $region28
        $region27: #{tpu_custom_call.1} parent=11 // pred_region
          _
        $region28: #{tpu_custom_call.1} parent=11 // pred_fallthru
          _
        // Predicated region
        $region29: #{tpu_custom_call.1} parent=11 // pred_check
          %p221 = pneg %p147
        $region30: #{tpu_custom_call.1} parent=11 // pred_check_branch
          %223 = sbr.rel (%p221) target = $region32
        $region31: #{tpu_custom_call.1} parent=11 // pred_region
          _
        $region32: #{tpu_custom_call.1} parent=11 // pred_fallthru
          _
        // Predicated region
        $region33: #{tpu_custom_call.1} parent=11 // pred_check
          %p224 = pneg %p168
        $region34: #{tpu_custom_call.1} parent=11 // pred_check_branch
          %226 = sbr.rel (%p224) target = $region36
        $region35: #{tpu_custom_call.1} parent=11 // pred_region
          _
        $region36: #{tpu_custom_call.1} parent=11 // pred_fallthru
          _
      $region12: #{tpu_custom_call.1} parent=5 // pred_fallthru
        _
      %p227 = scmp.lt.s32.totalorder %s16, 2
      // Predicated region
      $region37: #{tpu_custom_call.1} parent=5 // pred_check
        %p228 = pneg %p227
      $region38: #{tpu_custom_call.1} parent=5 // pred_check_branch
        %230 = sbr.rel (%p228) target = $region40
      $region39: #{tpu_custom_call.1} parent=5 // pred_region
        // Predicated region
        $region41: #{tpu_custom_call.1} parent=39 // pred_check
          %p231 = pneg %p36
        $region42: #{tpu_custom_call.1} parent=39 // pred_check_branch
          %233 = sbr.rel (%p231) target = $region44
        $region43: #{tpu_custom_call.1} parent=39 // pred_region
          %s234 = sand.u32 %s26, 1
          %s235 = sand.u32 %s26, 1
          %s236 = smul.addr %s235, 32
          %s237 = scalar_lea.vmem [#allocation2], %s236
          %s238 = smul.addr %s16, 8
          %s239 = scalar_lea.vmem %s0, %s238
          // Predicated region
          $region45: #{tpu_custom_call.1} parent=43 // pred_check
            _
          $region46: #{tpu_custom_call.1} parent=43 // pred_check_branch
            %241 = sbr.rel (0) target = $region48
          $region47: #{tpu_custom_call.1} parent=43 // pred_region
            // Predicated region
            $region49: #{tpu_custom_call.1} parent=47 // pred_check
              _
            $region50: #{tpu_custom_call.1} parent=47 // pred_check_branch
              %243 = sbr.rel (0) target = $region52
            $region51: #{tpu_custom_call.1} parent=47 // pred_region
              // Predicated region
              $region64: #{tpu_custom_call.1} parent=51 // pred_check
                _
              $region65: #{tpu_custom_call.1} parent=51 // pred_check_branch
                %265 = sbr.rel (0) target = $region67
              $region66: #{tpu_custom_call.1} parent=51 // pred_region
                loop: start=0, step=1, limit=1
                $region68: #{tpu_custom_call.1} parent=66 // loop_pre_header
                  _
                $region69: #{tpu_custom_call.1} parent=66 // loop_header
                  %s267 = sphi 0, %s271
                  %p268 = scmp.ge.s32.totalorder %s267, 1
                  %s272 = sphi %s239, %s239
                  %s273 = sphi %s237, %s237
                $region70: #{tpu_custom_call.1} parent=66 // loop_header_branch
                  %270 = sbr.rel (%p268) target = $region74
                $region71: #{tpu_custom_call.1} parent=66 // loop_body
                  %v274 = vld [vmem:[%s272] sm:$0xff]
                  %275 = vst [vmem:[%s273] sm:$0xff] %v274
                  %v276 = vld [vmem:[%s272 + $0x10] sm:$0xff]
                  %277 = vst [vmem:[%s273 + $0x8] sm:$0xff] %v276
                  %v278 = vld [vmem:[%s272 + $0x20] sm:$0xff]
                  %279 = vst [vmem:[%s273 + $0x10] sm:$0xff] %v278
                  %v280 = vld [vmem:[%s272 + $0x30] sm:$0xff]
                  %281 = vst [vmem:[%s273 + $0x18] sm:$0xff] %v280
                $region72: #{tpu_custom_call.1} parent=66 // loop_footer
                  %s271 = sadd.s32 1, %s267
                $region73: #{tpu_custom_call.1} parent=66 // loop_footer_branch
                  %266 = sbr.rel target = $region69
                $region74: #{tpu_custom_call.1} parent=66 // loop_exit
                  _
              $region67: #{tpu_custom_call.1} parent=51 // pred_fallthru
                _
              // Predicated region
              $region75: #{tpu_custom_call.1} parent=51 // pred_check
                _
              $region76: #{tpu_custom_call.1} parent=51 // pred_check_branch
                %283 = sbr.rel target = $region78
              $region77: #{tpu_custom_call.1} parent=51 // pred_region
                _
              $region78: #{tpu_custom_call.1} parent=51 // pred_fallthru
                _
            $region52: #{tpu_custom_call.1} parent=47 // pred_fallthru
              _
            // Predicated region
            $region53: #{tpu_custom_call.1} parent=47 // pred_check
              _
            $region54: #{tpu_custom_call.1} parent=47 // pred_check_branch
              %245 = sbr.rel target = $region56
            $region55: #{tpu_custom_call.1} parent=47 // pred_region
              %s247 = ssub.s32 256, 1
              loop: start=0, step=1, limit=1
              $region57: #{tpu_custom_call.1} parent=55 // loop_pre_header
                _
              $region58: #{tpu_custom_call.1} parent=55 // loop_header
                %s249 = sphi 0, %s253
                %p250 = scmp.ge.s32.totalorder %s249, 1
                %s254 = sphi %s239, %s239
                %s255 = sphi %s237, %s237
              $region59: #{tpu_custom_call.1} parent=55 // loop_header_branch
                %252 = sbr.rel (%p250) target = $region63
              $region60: #{tpu_custom_call.1} parent=55 // loop_body
                %v256 = vld [vmem:[%s254] sm:%s247]
                %257 = vst [vmem:[%s255] sm:%s247] %v256
                %v258 = vld [vmem:[%s254 + $0x10] sm:%s247]
                %259 = vst [vmem:[%s255 + $0x8] sm:%s247] %v258
                %v260 = vld [vmem:[%s254 + $0x20] sm:%s247]
                %261 = vst [vmem:[%s255 + $0x10] sm:%s247] %v260
                %v262 = vld [vmem:[%s254 + $0x30] sm:%s247]
                %263 = vst [vmem:[%s255 + $0x18] sm:%s247] %v262
              $region61: #{tpu_custom_call.1} parent=55 // loop_footer
                %s253 = sadd.s32 1, %s249
              $region62: #{tpu_custom_call.1} parent=55 // loop_footer_branch
                %248 = sbr.rel target = $region58
              $region63: #{tpu_custom_call.1} parent=55 // loop_exit
                _
            $region56: #{tpu_custom_call.1} parent=47 // pred_fallthru
              _
          $region48: #{tpu_custom_call.1} parent=43 // pred_fallthru
            _
          %284 = vnop
        $region44: #{tpu_custom_call.1} parent=39 // pred_fallthru
          _
      $region40: #{tpu_custom_call.1} parent=5 // pred_fallthru
        _
      %p285 = scmp.le.s32.totalorder 1, %s16
      %p286 = scmp.lt.s32.totalorder %s16, 3
      %p287 = pnand %p285, %p286
      %p288 = pneg %p287
      // Predicated region
      $region79: #{tpu_custom_call.1} parent=5 // pred_check
        _
      $region80: #{tpu_custom_call.1} parent=5 // pred_check_branch
        %290 = sbr.rel (%p287) target = $region82
      $region81: #{tpu_custom_call.1} parent=5 // pred_region
        %s291 = ssub.s32 %s16, 1
        %s292 = sand.u32 %s29, 1
        %s293 = sand.u32 %s29, 1
        %s294 = smul.addr %s293, 32
        %s295 = scalar_lea.vmem [#allocation2], %s294
        // Predicated region
        $region83: #{tpu_custom_call.1} parent=81 // pred_check
          %p296 = pneg %p42
        $region84: #{tpu_custom_call.1} parent=81 // pred_check_branch
          %298 = sbr.rel (%p296) target = $region86
        $region85: #{tpu_custom_call.1} parent=81 // pred_region
          _
        $region86: #{tpu_custom_call.1} parent=81 // pred_fallthru
          _
        %s299 = sand.u32 %s29, 1
        %s300 = sand.u32 %s29, 1
        %s301 = smul.addr %s300, 32
        %s302 = scalar_lea.vmem [#allocation2], %s301
        %p303 = pneg %p42
        %p304 = pneg %p39
        %p305 = pneg %p63
        %p306 = pneg %p60
        %p307 = pneg %p84
        %p308 = pneg %p81
        %p309 = pneg %p105
        %p310 = pneg %p102
        %p311 = pneg %p126
        %p312 = pneg %p123
        %p313 = pneg %p147
        %p314 = pneg %p144
        %p315 = pneg %p168
        %p316 = pneg %p165
        %p317 = pneg %p194
        %p318 = pneg %p191
        %s319 = sand.u32 %s181, 1
        %s320 = scalar_lea.sflag [#allocation4], %s319
        %s321 = sand.u32 %s181, 1
        %s322 = smul.addr %s321, 8
        %s323 = scalar_lea.vmem [#allocation3], %s322
        %v325 = vld [vmem:[%s295] sm:$0xff]
        %v326 = vld [vmem:[%s295 + $0x8] sm:$0xff]
        %v327 = vld [vmem:[%s295 + $0x10] sm:$0xff]
        %v328 = vld [vmem:[%s295 + $0x18] sm:$0xff]
        %v329 = vpack.c.bf16 %v326, %v325
        %v330 = vpack.c.bf16 %v328, %v327
        %v331 = vld [vmem:[%s1] sm:$0xf]
        %v332 = vld [vmem:[%s1 + $0x4] sm:$0xf]
        %v333 = vld [vmem:[%s1 + $0x8] sm:$0xf]
        %v334 = vld [vmem:[%s1 + $0xc] sm:$0xf]
        %v335 = vld [vmem:[%s1 + $0x10] sm:$0xf]
        %v336 = vld [vmem:[%s1 + $0x14] sm:$0xf]
        %v337 = vld [vmem:[%s1 + $0x18] sm:$0xf]
        %v338 = vld [vmem:[%s1 + $0x1c] sm:$0xf]
        %v339 = vld [vmem:[%s2] sm:$0xff]
        %v340 = vld [vmem:[%s2 + $0x8] sm:$0xff]
        %v341 = vld [vmem:[%s2 + $0x10] sm:$0xff]
        %v342 = vld [vmem:[%s2 + $0x18] sm:$0xff]
        %v343 = vld [vmem:[%s2 + $0x20] sm:$0xff]
        %v344 = vld [vmem:[%s2 + $0x28] sm:$0xff]
        %v345 = vld [vmem:[%s2 + $0x30] sm:$0xff]
        %v346 = vld [vmem:[%s2 + $0x38] sm:$0xff]
        %348 = vset.pattern.permute.xlu0 0
        %349 = vperm.xlu0 %348, %v339
        %v350 = vpop.permute.xlu0 %349
        %353 = vset.pattern.permute.xlu0 0
        %354 = vperm.xlu0 %353, %v340
        %v355 = vpop.permute.xlu0 %354
        %358 = vset.pattern.permute.xlu0 0
        %359 = vperm.xlu0 %358, %v341
        %v360 = vpop.permute.xlu0 %359
        %363 = vset.pattern.permute.xlu0 0
        %364 = vperm.xlu0 %363, %v342
        %v365 = vpop.permute.xlu0 %364
        %368 = vset.pattern.permute.xlu0 0
        %369 = vperm.xlu0 %368, %v343
        %v370 = vpop.permute.xlu0 %369
        %373 = vset.pattern.permute.xlu0 0
        %374 = vperm.xlu0 %373, %v344
        %v375 = vpop.permute.xlu0 %374
        %378 = vset.pattern.permute.xlu0 0
        %379 = vperm.xlu0 %378, %v345
        %v380 = vpop.permute.xlu0 %379
        %383 = vset.pattern.permute.xlu0 0
        %384 = vperm.xlu0 %383, %v346
        %v385 = vpop.permute.xlu0 %384
        %v395 = vunpack.c.l.b16 %v331
        %v396 = vunpack.c.l.b16 %v332
        %v397 = vunpack.c.l.b16 %v333
        %v398 = vunpack.c.l.b16 %v334
        %v399 = vunpack.c.l.b16 %v335
        %v400 = vunpack.c.l.b16 %v336
        %v401 = vunpack.c.l.b16 %v337
        %v402 = vunpack.c.l.b16 %v338
        %v403 = vpack.c.b16 %v396, %v395
        %v404 = vpack.c.b16 %v398, %v397
        %v405 = vpack.c.b16 %v400, %v399
        %v406 = vpack.c.b16 %v402, %v401
        %vm407 = vcmask 261120
        %v409 = vsel %vm407, %v403, 0
        %v412 = vsel %vm407, %v404, 0
        %v415 = vsel %vm407, %v405, 0
        %v418 = vsel %vm407, %v406, 0
        %420 = vmatprep.subr.bf16.mxu0 0
        %421 = vmatpush1.bf16.msra.mxu0 0
        %422 = vmatprep.subr.bf16.mxu0 0
        %423 = vmatpush1.bf16.msra.mxu0 0
        %424 = vmatprep.subr.bf16.mxu0 0
        %425 = vmatpush1.bf16.msra.mxu0 0
        %426 = vmatprep.subr.bf16.mxu0 0
        %427 = vmatpush1.bf16.msra.mxu0 0
        %428 = vmatprep.subr.bf16.mxu0 0
        %429 = vmatpush1.bf16.msra.mxu0 0
        %430 = vmatprep.subr.bf16.mxu0 0
        %431 = vmatpush1.bf16.msra.mxu0 0
        %432 = vmatprep.subr.bf16.mxu0 0
        %433 = vmatpush1.bf16.msra.mxu0 %v330
        %434 = vmatprep.subr.bf16.mxu0 0
        %435 = vmatpush1.bf16.msra.mxu0 %v329
        %436 = vmatprep.subr.bf16.mxu0 0
        %437 = vmatpush2.bf16.msra.mxu0 0
        %438 = vmatprep.subr.bf16.mxu0 0
        %439 = vmatpush2.bf16.msra.mxu0 0
        %440 = vmatprep.subr.bf16.mxu0 0
        %441 = vmatpush2.bf16.msra.mxu0 0
        %442 = vmatprep.subr.bf16.mxu0 0
        %443 = vmatpush2.bf16.msra.mxu0 0
        %444 = vmatprep.subr.bf16.mxu0 0
        %445 = vmatpush2.bf16.msra.mxu0 0
        %446 = vmatprep.subr.bf16.mxu0 0
        %447 = vmatpush2.bf16.msra.mxu0 0
        %448 = vmatprep.subr.bf16.mxu0 0
        %449 = vmatpush2.bf16.msra.mxu0 0
        %450 = vmatprep.subr.bf16.mxu0 0
        %451 = vmatpush2.bf16.msra.mxu0 0
        %452 = vmatprep.mubr.bf16.mxu0 0
        %453 = vmatmul.mubr.bf16.gmra.mxu0 %v409
        %v454 = vpop.f32.mrf.mxu0
        %v455 = vadd.f32 %v350, %v454
        %v456 = vpop.f32.mrf.mxu0
        %v457 = vpop.f32.mrf.mxu0
        %v458 = vadd.f32 %v355, %v457
        %v459 = vpop.f32.mrf.mxu0
        %460 = vmatprep.mubr.bf16.mxu0 0
        %461 = vmatmul.mubr.bf16.gmra.mxu0 %v412
        %v462 = vpop.f32.mrf.mxu0
        %v463 = vadd.f32 %v360, %v462
        %v464 = vpop.f32.mrf.mxu0
        %v465 = vpop.f32.mrf.mxu0
        %v466 = vadd.f32 %v365, %v465
        %v467 = vpop.f32.mrf.mxu0
        %468 = vmatprep.mubr.bf16.mxu0 0
        %469 = vmatmul.mubr.bf16.gmra.mxu0 %v415
        %v470 = vpop.f32.mrf.mxu0
        %v471 = vadd.f32 %v370, %v470
        %v472 = vpop.f32.mrf.mxu0
        %v473 = vpop.f32.mrf.mxu0
        %v474 = vadd.f32 %v375, %v473
        %v475 = vpop.f32.mrf.mxu0
        %476 = vmatprep.mubr.bf16.mxu0 0
        %477 = vmatmul.mubr.bf16.gmra.mxu0 %v418
        %v478 = vpop.f32.mrf.mxu0
        %v479 = vadd.f32 %v380, %v478
        %v480 = vpop.f32.mrf.mxu0
        %v481 = vpop.f32.mrf.mxu0
        %v482 = vadd.f32 %v385, %v481
        %v483 = vpop.f32.mrf.mxu0
        %484 = vdwg.mxu0
        %v485 = vmax.f32 %v455, 0.0
        %v486 = vmax.f32 %v458, 0.0
        %v487 = vmax.f32 %v463, 0.0
        %v488 = vmax.f32 %v466, 0.0
        %v489 = vmax.f32 %v471, 0.0
        %v490 = vmax.f32 %v474, 0.0
        %v491 = vmax.f32 %v479, 0.0
        %v492 = vmax.f32 %v482, 0.0
        %v493 = vld [vmem:[%s3] sm:$0xf]
        %v494 = vld [vmem:[%s3 + $0x4] sm:$0xf]
        %v495 = vld [vmem:[%s3 + $0x8] sm:$0xf]
        %v496 = vld [vmem:[%s3 + $0xc] sm:$0xf]
        %v497 = vpack.c.bf16 %v486, %v485
        %v498 = vpack.c.bf16 %v488, %v487
        %v499 = vpack.c.bf16 %v490, %v489
        %v500 = vpack.c.bf16 %v492, %v491
        %v501 = vld [vmem:[%s4] sm:$0xff]
        %v502 = vld [vmem:[%s4 + $0x8] sm:$0xff]
        %v503 = vld [vmem:[%s4 + $0x10] sm:$0xff]
        %v504 = vld [vmem:[%s4 + $0x18] sm:$0xff]
        %506 = vset.pattern.permute.xlu0 0
        %507 = vperm.xlu0 %506, %v501
        %v508 = vpop.permute.xlu0 %507
        %511 = vset.pattern.permute.xlu0 0
        %512 = vperm.xlu0 %511, %v502
        %v513 = vpop.permute.xlu0 %512
        %516 = vset.pattern.permute.xlu0 0
        %517 = vperm.xlu0 %516, %v503
        %v518 = vpop.permute.xlu0 %517
        %521 = vset.pattern.permute.xlu0 0
        %522 = vperm.xlu0 %521, %v504
        %v523 = vpop.permute.xlu0 %522
        %v529 = vunpack.c.l.b16 %v493
        %v530 = vunpack.c.l.b16 %v494
        %v531 = vunpack.c.l.b16 %v495
        %v532 = vunpack.c.l.b16 %v496
        %v533 = vpack.c.b16 %v530, %v529
        %v534 = vpack.c.b16 %v532, %v531
        %vm535 = vcmask 523264
        %v537 = vsel %vm535, %v533, 0
        %v540 = vsel %vm535, %v534, 0
        %542 = vmatprep.subr.bf16.mxu0 0
        %543 = vmatpush1.bf16.msra.mxu0 0
        %544 = vmatprep.subr.bf16.mxu0 0
        %545 = vmatpush1.bf16.msra.mxu0 0
        %546 = vmatprep.subr.bf16.mxu0 0
        %547 = vmatpush1.bf16.msra.mxu0 0
        %548 = vmatprep.subr.bf16.mxu0 0
        %549 = vmatpush1.bf16.msra.mxu0 0
        %550 = vmatprep.subr.bf16.mxu0 0
        %551 = vmatpush1.bf16.msra.mxu0 %v500
        %552 = vmatprep.subr.bf16.mxu0 0
        %553 = vmatpush1.bf16.msra.mxu0 %v499
        %554 = vmatprep.subr.bf16.mxu0 0
        %555 = vmatpush1.bf16.msra.mxu0 %v498
        %556 = vmatprep.subr.bf16.mxu0 0
        %557 = vmatpush1.bf16.msra.mxu0 %v497
        %558 = vmatprep.subr.bf16.mxu0 0
        %559 = vmatpush2.bf16.msra.mxu0 0
        %560 = vmatprep.subr.bf16.mxu0 0
        %561 = vmatpush2.bf16.msra.mxu0 0
        %562 = vmatprep.subr.bf16.mxu0 0
        %563 = vmatpush2.bf16.msra.mxu0 0
        %564 = vmatprep.subr.bf16.mxu0 0
        %565 = vmatpush2.bf16.msra.mxu0 0
        %566 = vmatprep.subr.bf16.mxu0 0
        %567 = vmatpush2.bf16.msra.mxu0 0
        %568 = vmatprep.subr.bf16.mxu0 0
        %569 = vmatpush2.bf16.msra.mxu0 0
        %570 = vmatprep.subr.bf16.mxu0 0
        %571 = vmatpush2.bf16.msra.mxu0 0
        %572 = vmatprep.subr.bf16.mxu0 0
        %573 = vmatpush2.bf16.msra.mxu0 0
        %574 = vmatprep.mubr.bf16.mxu0 0
        %575 = vmatmul.mubr.bf16.gmra.mxu0 %v537
        %v576 = vpop.f32.mrf.mxu0
        %v577 = vadd.f32 %v508, %v576
        %v578 = vpop.f32.mrf.mxu0
        %v579 = vpop.f32.mrf.mxu0
        %v580 = vadd.f32 %v513, %v579
        %v581 = vpop.f32.mrf.mxu0
        %582 = vmatprep.mubr.bf16.mxu0 0
        %583 = vmatmul.mubr.bf16.gmra.mxu0 %v540
        %v584 = vpop.f32.mrf.mxu0
        %v585 = vadd.f32 %v518, %v584
        %v586 = vpop.f32.mrf.mxu0
        %v587 = vpop.f32.mrf.mxu0
        %v588 = vadd.f32 %v523, %v587
        %v589 = vpop.f32.mrf.mxu0
        %590 = vdwg.mxu0
        %v591 = vmax.f32 %v577, 0.0
        %v592 = vmax.f32 %v580, 0.0
        %v593 = vmax.f32 %v585, 0.0
        %v594 = vmax.f32 %v588, 0.0
        %v595 = vld [vmem:[%s5] sm:$0xf]
        %v596 = vpack.c.bf16 %v592, %v591
        %v597 = vpack.c.bf16 %v594, %v593
        %v598 = vld [vmem:[%s6] sm:$0xff]
        %600 = vset.pattern.permute.xlu0 0
        %601 = vperm.xlu0 %600, %v598
        %v602 = vpop.permute.xlu0 %601
        %v605 = vsel %vm407, %v595, 0
        %607 = vmatprep.subr.bf16.mxu0 0
        %608 = vmatpush1.bf16.msra.mxu0 0
        %609 = vmatprep.subr.bf16.mxu0 0
        %610 = vmatpush1.bf16.msra.mxu0 0
        %611 = vmatprep.subr.bf16.mxu0 0
        %612 = vmatpush1.bf16.msra.mxu0 0
        %613 = vmatprep.subr.bf16.mxu0 0
        %614 = vmatpush1.bf16.msra.mxu0 0
        %615 = vmatprep.subr.bf16.mxu0 0
        %616 = vmatpush1.bf16.msra.mxu0 0
        %617 = vmatprep.subr.bf16.mxu0 0
        %618 = vmatpush1.bf16.msra.mxu0 0
        %619 = vmatprep.subr.bf16.mxu0 0
        %620 = vmatpush1.bf16.msra.mxu0 %v597
        %621 = vmatprep.subr.bf16.mxu0 0
        %622 = vmatpush1.bf16.msra.mxu0 %v596
        %623 = vmatprep.subr.bf16.mxu0 0
        %624 = vmatpush2.bf16.msra.mxu0 0
        %625 = vmatprep.subr.bf16.mxu0 0
        %626 = vmatpush2.bf16.msra.mxu0 0
        %627 = vmatprep.subr.bf16.mxu0 0
        %628 = vmatpush2.bf16.msra.mxu0 0
        %629 = vmatprep.subr.bf16.mxu0 0
        %630 = vmatpush2.bf16.msra.mxu0 0
        %631 = vmatprep.subr.bf16.mxu0 0
        %632 = vmatpush2.bf16.msra.mxu0 0
        %633 = vmatprep.subr.bf16.mxu0 0
        %634 = vmatpush2.bf16.msra.mxu0 0
        %635 = vmatprep.subr.bf16.mxu0 0
        %636 = vmatpush2.bf16.msra.mxu0 0
        %637 = vmatprep.subr.bf16.mxu0 0
        %638 = vmatpush2.bf16.msra.mxu0 0
        %639 = vmatprep.mubr.bf16.mxu0 0
        %640 = vmatmul.mubr.bf16.gmra.mxu0 %v605
        %v641 = vpop.f32.mrf.mxu0
        %v642 = vadd.f32 %v602, %v641
        %v643 = vpop.f32.mrf.mxu0
        %v644 = vpop.f32.mrf.mxu0
        %v645 = vpop.f32.mrf.mxu0
        %646 = vdwg.mxu0
        %647 = vst [vmem:[%s323] sm:$0xff] %v642
        %s648 = sand.u32 %s181, 1
        %s649 = scalar_lea.sflag [#allocation4], %s648
        %s650 = sand.u32 %s181, 1
        %s651 = smul.addr %s650, 8
        %s652 = scalar_lea.vmem [#allocation3], %s651
        // Predicated region
        $region87: #{tpu_custom_call.1} parent=81 // pred_check
          %p653 = pneg %p191
        $region88: #{tpu_custom_call.1} parent=81 // pred_check_branch
          %655 = sbr.rel (%p653) target = $region90
        $region89: #{tpu_custom_call.1} parent=81 // pred_region
          %s657 = ssub.s32 128, 128
          %658 = vsyncadd %s649, %s657
          %s659 = smul.addr %s21, 128
          %s660 = scalar_lea.hbm %s7, %s659
          %s662 = sshll.u32 %s652, 4
          %s663 = int_to_ptr.vmem [resolvable:$true] %s662
          %665 = dma.vmem_to_hbm [thread:$0]  %s663, 128, %s660, %s649
        $region90: #{tpu_custom_call.1} parent=81 // pred_fallthru
          _
      $region82: #{tpu_custom_call.1} parent=5 // pred_fallthru
        _
      %p666 = scmp.le.s32.totalorder 2, %s16
      // Predicated region
      $region91: #{tpu_custom_call.1} parent=5 // pred_check
        %p667 = pneg %p666
      $region92: #{tpu_custom_call.1} parent=5 // pred_check_branch
        %669 = sbr.rel (%p667) target = $region94
      $region93: #{tpu_custom_call.1} parent=5 // pred_region
        %s670 = ssub.s32 %s16, 2
        // Predicated region
        $region95: #{tpu_custom_call.1} parent=93 // pred_check
          %p671 = pneg %p197
        $region96: #{tpu_custom_call.1} parent=93 // pred_check_branch
          %673 = sbr.rel (%p671) target = $region98
        $region97: #{tpu_custom_call.1} parent=93 // pred_region
          %s674 = sand.u32 %s182, 1
          %s675 = scalar_lea.sflag [#allocation4], %s674
          %s676 = sand.u32 %s182, 1
          %s677 = smul.addr %s676, 8
          %s678 = scalar_lea.vmem [#allocation3], %s677
          %679 = dma.done %s675, 128
        $region98: #{tpu_custom_call.1} parent=93 // pred_fallthru
          _
      $region94: #{tpu_custom_call.1} parent=5 // pred_fallthru
        _
    $region6: #{tpu_custom_call.1} parent=1 // loop_footer
      %s20 = sadd.s32 1, %s16
    $region7: #{tpu_custom_call.1} parent=1 // loop_footer_branch
      %15 = sbr.rel target = $region3
    $region8: #{tpu_custom_call.1} parent=1 // loop_exit
      _
    %680 = vsyncpa [#allocation4], 1
    %s681 = scalar_lea.sflag [#allocation4], 1
    %682 = vsyncpa %s681, 1

</llo_original>
